<compile_context>
chip_gen: v6e
topology: v6e:2x2x1
jax: 0.10.0
libtpu: 0.0.40
codegen_flags: <defaults>
</compile_context>

<pallas_src>
import functools

import jax
import jax.numpy as jnp
import numpy as np
from jax import lax
from jax.experimental import pallas as pl
from jax.experimental.pallas import tpu as pltpu

EPS_CE = 1e-8     # CrossEntropyLossStable eps (default)
EPS_PEER = 1e-5   # CrossEntropyLossRegStable eps (default)
EPS_CAL = 1e-5    # CrossEntropyStableCALMultiple eps (default)

_SCALAR = jax.ShapeDtypeStruct((1, 1), jnp.float32)
_VMEM_SPACE = pltpu.MemorySpace.VMEM
_SMEM_SPACE = pltpu.MemorySpace.SMEM


def _round_up(x, m):
    return (x + m - 1) // m * m


def _softmax_rows(x):
    m = jnp.max(x, axis=-1, keepdims=True)
    e = jnp.exp(x - m)
    return e / jnp.sum(e, axis=-1, keepdims=True)


# ---------------------------------------------------------------------------
# Fused CAL kernel: base stable-CE + peer regularization + CAL term + loss_rec.
# Grid = (batch_tiles, samples_per_tile); the inner axis streams one gathered
# (1, C, C) T slab per step (auto double-buffered by the pipeline).
# ---------------------------------------------------------------------------
def _fused_cal_kernel(raw_idx_ref,                                   # prefetch (Bp,) i32
                      outputs_ref, labels_ref, peer_ref, prior_ref,  # (TB,C),(TB,1),(TB,C),(1,C)
                      mean_all_ref, p_y_ref, alpha_ref, t_ref,       # (C,C),(C,1),(1,1) SMEM,(1,C,C)
                      total_ref, base_ref, peer_out_ref, cal_ref,    # (1,1) SMEM outs
                      loss_rec_ref,                                  # (C,C) VMEM out (accumulator)
                      logout_sc, ind_sc, acc_a, acc_b, acc_s,        # VMEM scratch
                      acc_sums,                                      # SMEM (2,) scratch
                      *, batch):
    i = pl.program_id(0)          # batch-tile index
    b = pl.program_id(1)          # sample-within-tile index
    nt = pl.num_programs(0)
    TB, C = outputs_ref.shape

    # --- global init (first grid step) -------------------------------------
    @pl.when((i == 0) & (b == 0))
    def _init():
        acc_sums[0] = 0.0
        acc_sums[1] = 0.0
        acc_a[...] = jnp.zeros_like(acc_a)
        acc_b[...] = jnp.zeros_like(acc_b)
        acc_s[...] = jnp.zeros_like(acc_s)
        loss_rec_ref[...] = jnp.zeros_like(loss_rec_ref)

    # --- once per batch tile: shared softmax, base/peer partials, log_out ---
    @pl.when(b == 0)
    def _per_tile():
        rowvalid = ((jax.lax.broadcasted_iota(jnp.int32, (TB, 1), 0) + i * TB)
                    < batch).astype(jnp.float32)                      # mask padded rows

        sm = _softmax_rows(outputs_ref[...])                          # (TB, C), shared
        cls = jax.lax.broadcasted_iota(jnp.int32, (TB, C), 1)
        onehot = (cls == labels_ref[...]).astype(jnp.float32)
        acc_sums[0] += jnp.sum(
            rowvalid * jnp.sum(onehot * jnp.log(sm + EPS_CE),
                               axis=-1, keepdims=True))

        smp = _softmax_rows(peer_ref[...])
        acc_sums[1] += jnp.sum(
            rowvalid * jnp.sum(prior_ref[...] * jnp.log(smp + EPS_PEER),
                               axis=-1, keepdims=True))

        # CAL log_out for the whole tile, reused by the per-sample steps below.
        logout_sc[...] = -jnp.log(sm + EPS_CAL)

    # --- per-sample CAL contribution (t_ref is the pipelined gathered slab) --
    valid = ((i * TB + b) < batch).astype(jnp.float32)                # padded-sample mask
    t_slab = t_ref[0]                                                 # (C, C): T[i_cls, j_cls, raw_idx[sample]]
    pos = (t_slab > 0.0).astype(jnp.float32)
    ind_col = jnp.sum(pos, axis=1, keepdims=True) * valid             # (C, 1): indicator[i_cls]
    lo_row = logout_sc[pl.ds(b, 1), :]                                # (1, C): log_out[sample, :]

    w = t_slab * ind_col                                              # (C, C)
    acc_a[...] += w * lo_row
    acc_b[...] += w
    acc_s[...] += ind_col
    # lane-oriented indicator row so loss_rec can be a per-tile MXU contraction
    ind_sc[pl.ds(b, 1), :] = (jnp.sum(pos, axis=1) * valid)[None, :]  # (1, C)

    # --- end of tile: rank-TB MXU update of loss_rec -------------------------
    @pl.when(b == TB - 1)
    def _tile_flush():
        # loss_rec[i, j] += sum_b ind[b, i] * log_out[b, j]
        loss_rec_ref[...] += lax.dot_general(
            ind_sc[...], logout_sc[...],
            dimension_numbers=(((0,), (0,)), ((), ())),
            preferred_element_type=jnp.float32)

    # --- final grid step: convert running sums into the outputs --------------
    @pl.when((i == nt - 1) & (b == TB - 1))
    def _finalize():
        base = -acc_sums[0] / batch
        peer = -acc_sums[1] / batch
        s = acc_s[...]                                                # (C, 1)
        s = jnp.where(s == 0.0, 1.0, s)
        cal = jnp.sum((p_y_ref[...] / s) *
                      (acc_a[...] - mean_all_ref[...] * acc_b[...]))
        base_ref[0, 0] = base
        peer_out_ref[0, 0] = peer
        cal_ref[0, 0] = cal
        total_ref[0, 0] = base - alpha_ref[0, 0] * peer - cal


def peer_loss_cal_forward(outputs, labels, output_peer, noisy_prior,
                          t_mat_t, raw_idx, loss_mean_all, p_y_distill, alpha):
    B, C = outputs.shape
    # Batch tiling: <=128 samples per tile, multiple of 8 sublanes, pad B up.
    n_tiles = -(-B // 128)
    TB = _round_up(-(-B // n_tiles), 8)
    Bp = n_tiles * TB
    pad = Bp - B

    outputs_f = jnp.asarray(outputs, jnp.float32)
    peer_f = jnp.asarray(output_peer, jnp.float32)
    labels_i = jnp.asarray(labels, jnp.int32).reshape(B, 1)
    idx_i = jnp.asarray(raw_idx, jnp.int32).reshape(B)
    if pad:
        outputs_f = jnp.pad(outputs_f, ((0, pad), (0, 0)))
        peer_f = jnp.pad(peer_f, ((0, pad), (0, 0)))
        labels_i = jnp.pad(labels_i, ((0, pad), (0, 0)))
        idx_i = jnp.pad(idx_i, ((0, pad),))   # padded samples gather row 0, masked in-kernel

    alpha_arr = jnp.asarray(alpha, jnp.float32).reshape(1, 1)

    # Explicit VMEM budget (f32, lane/sublane padded) with 2x headroom — keeps
    # the kernel inside v7x's scoped limit and v5e's 16 MiB default.
    cl, cs = _round_up(C, 128), _round_up(C, 8)
    vmem_bytes = 4 * (2 * 2 * TB * cl          # outputs + peer tiles, double-buffered
                      + 2 * TB * 128           # labels tiles
                      + 2 * cs * cl            # gathered T slab double buffer
                      + 2 * TB * cl            # logout / indicator scratch
                      + 4 * cs * cl            # acc_a, acc_b, loss_rec, mean_all
                      + cs * 128 + 2 * 8 * cl) # p_y, acc_s, prior, misc
    vmem_limit = int(min(100 * 2 ** 20, max(4 * 2 ** 20, 2 * vmem_bytes)))

    cost = pl.CostEstimate(
        flops=12 * Bp * C * C + 40 * Bp * C,
        transcendentals=5 * Bp * C,
        bytes_accessed=4 * (Bp * C * C + 4 * Bp * C + 4 * C * C + Bp + 2 * C))

    scalar_out = pl.BlockSpec(memory_space=_SMEM_SPACE)

    grid_spec = pltpu.PrefetchScalarGridSpec(
        num_scalar_prefetch=1,
        grid=(n_tiles, TB),
        in_specs=[
            pl.BlockSpec((TB, C), lambda i, b, idx: (i, 0)),    # outputs
            pl.BlockSpec((TB, 1), lambda i, b, idx: (i, 0)),    # labels
            pl.BlockSpec((TB, C), lambda i, b, idx: (i, 0)),    # output_peer
            pl.BlockSpec((1, C), lambda i, b, idx: (0, 0)),     # noisy_prior
            pl.BlockSpec((C, C), lambda i, b, idx: (0, 0)),     # loss_mean_all
            pl.BlockSpec((C, 1), lambda i, b, idx: (0, 0)),     # P_y_distill
            pl.BlockSpec(memory_space=_SMEM_SPACE),             # alpha (1, 1)
            # scalar-prefetch gather: one (1, C, C) T slab per inner grid step
            pl.BlockSpec((1, C, C), lambda i, b, idx: (idx[i * TB + b], 0, 0)),
        ],
        # TODO(synk): loss_rec could be emitted lane-dense as (1, C*C); kept
        # as (C, C) — it is only written once per tile from the accumulator.
        out_specs=(scalar_out, scalar_out, scalar_out, scalar_out,
                   pl.BlockSpec((C, C), lambda i, b, idx: (0, 0))),
        scratch_shapes=[
            pltpu.VMEM((TB, C), jnp.float32),   # logout_sc
            pltpu.VMEM((TB, C), jnp.float32),   # ind_sc (lane-oriented rows)
            pltpu.VMEM((C, C), jnp.float32),    # acc_a
            pltpu.VMEM((C, C), jnp.float32),    # acc_b
            pltpu.VMEM((C, 1), jnp.float32),    # acc_s
            pltpu.SMEM((2,), jnp.float32),      # base / peer running sums
        ])

    kernel = functools.partial(_fused_cal_kernel, batch=B)
    total, base, peer, cal, loss_rec = pl.pallas_call(
        kernel,
        out_shape=(_SCALAR, _SCALAR, _SCALAR, _SCALAR,
                   jax.ShapeDtypeStruct((C, C), jnp.float32)),
        grid_spec=grid_spec,
        compiler_params=pltpu.CompilerParams(
            dimension_semantics=("arbitrary", "arbitrary"),
            vmem_limit_bytes=vmem_limit),
        cost_estimate=cost,
    )(idx_i, outputs_f, labels_i, peer_f,
      jnp.asarray(noisy_prior, jnp.float32).reshape(1, C),
      jnp.asarray(loss_mean_all, jnp.float32),
      jnp.asarray(p_y_distill, jnp.float32).reshape(C, 1),
      alpha_arr,
      jnp.asarray(t_mat_t, jnp.float32))
    return total[0, 0], base[0, 0], peer[0, 0], cal[0, 0], loss_rec


# ---------------------------------------------------------------------------
# Plain 'crossentropy' path: base CE + peer term, one softmax pass over the
# stacked (2, B, C) slab.  Small enough to stay a single grid point.
# TODO(synk): add a batch grid here too if B*C ever approaches the VMEM limit.
# ---------------------------------------------------------------------------
def _base_peer_kernel(stacked_ref, labels_ref, prior_ref, alpha_ref,
                      total_ref, base_ref, peer_out_ref):
    _, B, C = stacked_ref.shape
    sm = _softmax_rows(stacked_ref[...])                              # (2, B, C) single pass
    cls = jax.lax.broadcasted_iota(jnp.int32, (B, C), 1)
    onehot = (cls == labels_ref[...]).astype(jnp.float32)
    base = -jnp.mean(jnp.sum(onehot * jnp.log(sm[0] + EPS_CE),
                             axis=-1, keepdims=True))
    peer = -jnp.mean(jnp.sum(prior_ref[...] * jnp.log(sm[1] + EPS_PEER),
                             axis=-1, keepdims=True))
    base_ref[0, 0] = base
    peer_out_ref[0, 0] = peer
    total_ref[0, 0] = base - alpha_ref[0, 0] * peer


def peer_loss_forward(outputs, labels, output_peer, noisy_prior, alpha):
    B, C = outputs.shape
    stacked = jnp.stack([jnp.asarray(outputs, jnp.float32),
                         jnp.asarray(output_peer, jnp.float32)], axis=0)
    cost = pl.CostEstimate(flops=30 * B * C, transcendentals=6 * B * C,
                           bytes_accessed=4 * (2 * B * C + B + C))
    total, base, peer = pl.pallas_call(
        _base_peer_kernel,
        out_shape=(_SCALAR, _SCALAR, _SCALAR),
        in_specs=[pl.BlockSpec(memory_space=_VMEM_SPACE),   # stacked (2, B, C)
                  pl.BlockSpec(memory_space=_VMEM_SPACE),   # labels  (B, 1)
                  pl.BlockSpec(memory_space=_VMEM_SPACE),   # prior   (1, C)
                  pl.BlockSpec(memory_space=_SMEM_SPACE)],  # alpha   (1, 1)
        out_specs=(pl.BlockSpec(memory_space=_SMEM_SPACE),) * 3,
        cost_estimate=cost,
    )(stacked,
      jnp.asarray(labels, jnp.int32).reshape(B, 1),
      jnp.asarray(noisy_prior, jnp.float32).reshape(1, C),
      jnp.asarray(alpha, jnp.float32).reshape(1, 1))
    return total[0, 0], base[0, 0], peer[0, 0]


# ---------------------------------------------------------------------------
# PeerLossRegCE wrapper (parameter plumbing only).
# ---------------------------------------------------------------------------
class PeerLossRegCE:
    def __init__(self, alpha, noisy_prior, loss_name,
                 T_mat=None, T_mat_true=None, P_y_distill=None):
        self._lossname = loss_name
        self._alpha = float(alpha) if alpha is not None else 1.0
        self._noisy_prior = jnp.asarray(noisy_prior, jnp.float32)
        # Pre-transpose T_mat once: (C, C, N) -> (N, C, C) so the per-sample
        # gather of T_mat[:, :, raw_idx[b]] is one contiguous leading-axis tile.
        self._T_mat_t = (None if T_mat is None
                         else jnp.transpose(jnp.asarray(T_mat, jnp.float32),
                                            (2, 0, 1)))
        # TODO(synk): T_mat_true != None branch of CAL not implemented (the
        # torch module returns zeros for the *_true outputs when it is None).
        self._T_mat_true = T_mat_true
        self._P_y_distill = (None if P_y_distill is None
                             else jnp.asarray(P_y_distill, jnp.float32))

    def __call__(self, outputs, labels, output_peer,
                 raw_idx=None, loss_mean_all=None):
        if self._lossname == 'crossentropy_CAL':
            return peer_loss_cal_forward(
                outputs, labels, output_peer, self._noisy_prior,
                self._T_mat_t, raw_idx, loss_mean_all, self._P_y_distill,
                self._alpha)
        return peer_loss_forward(
            outputs, labels, output_peer, self._noisy_prior, self._alpha)


# ---------------------------------------------------------------------------
# Pure-JAX reference (mirrors the torch code) for correctness checking.
# ---------------------------------------------------------------------------
def reference(outputs, labels, output_peer, noisy_prior, alpha,
              T_mat, P_y_distill, raw_idx, loss_mean_all):
    B, C = outputs.shape
    sm = jax.nn.softmax(outputs, axis=-1)
    base = -jnp.mean(jnp.log(sm + EPS_CE)[jnp.arange(B), labels])
    smp = jax.nn.softmax(output_peer, axis=-1)
    peer = -jnp.mean(jnp.sum(noisy_prior * jnp.log(smp + EPS_PEER), axis=1))

    log_out = -jnp.log(sm + EPS_CAL)
    T = T_mat[:, :, raw_idx]
    ind = jnp.broadcast_to(
        jnp.sum((T > 0.0).astype(jnp.float32), axis=1)[:, None, :], (C, C, B))
    loss_all = jnp.broadcast_to(log_out.T[None, :, :], (C, C, B))
    loss_all_norm = (loss_all - loss_mean_all[:, :, None]) * ind
    loss_rec = jnp.sum(ind * loss_all, axis=2)
    ind_sum = jnp.sum(ind, axis=2)
    ind_sum = jnp.where(ind_sum == 0.0, 1.0, ind_sum)
    cal = jnp.sum(jnp.sum(jnp.sum(T * loss_all_norm, axis=2) / ind_sum, axis=1)
                  * P_y_distill)
    return base - alpha * peer - cal, base, peer, cal, loss_rec


if __name__ == "__main__":
    configs = [
        # (B, C, N): batch, num_class, dataset size (T_mat trailing dim)
        (8, 16, 32),     # aligned batch, single tile
        (20, 10, 48),    # padded batch, class count not (8,128)-aligned
        (200, 12, 64),   # multiple batch tiles, padding
    ]
    alpha = 0.5
    for (B, C, N) in configs:
        key = jax.random.PRNGKey(0)
        k1, k2, k3, k4, k5, k6, k7, k8 = jax.random.split(key, 8)

        outputs = jax.random.normal(k1, (B, C), dtype=jnp.float32)
        labels = jax.random.randint(k2, (B,), 0, C, dtype=jnp.int32)
        output_peer = jax.random.normal(k3, (B, C), dtype=jnp.float32)
        noisy_prior = jax.nn.softmax(jax.random.normal(k4, (C,), dtype=jnp.float32))

        T_raw = jax.random.uniform(k5, (C, C, N), dtype=jnp.float32)
        T_mat = jnp.where(T_raw > 0.5, T_raw, 0.0)       # sparse -> exercises indicator
        P_y_distill = jax.nn.softmax(jax.random.normal(k6, (C,), dtype=jnp.float32))
        loss_mean_all = 0.1 * jax.random.normal(k7, (C, C), dtype=jnp.float32)
        raw_idx = jax.random.randint(k8, (B,), 0, N, dtype=jnp.int32)

        # --- CAL path ---
        loss_fn = PeerLossRegCE(alpha, noisy_prior, 'crossentropy_CAL',
                                T_mat=T_mat, T_mat_true=None,
                                P_y_distill=P_y_distill)
        got = loss_fn(outputs, labels, output_peer, raw_idx=raw_idx,
                      loss_mean_all=loss_mean_all)
        jax.block_until_ready(got)

        ref = reference(outputs, labels, output_peer, noisy_prior, alpha,
                        T_mat, P_y_distill, raw_idx, loss_mean_all)
        for g, r in zip(got, ref):
            np.testing.assert_allclose(np.asarray(g), np.asarray(r),
                                       rtol=1e-4, atol=1e-4)

        # --- plain 'crossentropy' path ---
        plain_fn = PeerLossRegCE(alpha, noisy_prior, 'crossentropy')
        t2, b2, p2 = plain_fn(outputs, labels, output_peer)
        jax.block_until_ready((t2, b2, p2))
        np.testing.assert_allclose(np.asarray(b2), np.asarray(ref[1]),
                                   rtol=1e-4, atol=1e-4)
        np.testing.assert_allclose(np.asarray(p2), np.asarray(ref[2]),
                                   rtol=1e-4, atol=1e-4)
        np.testing.assert_allclose(np.asarray(t2),
                                   np.asarray(ref[1] - alpha * ref[2]),
                                   rtol=1e-4, atol=1e-4)

    print("KERNEL_OK")
</pallas_src>

<mosaic_0001>
module attributes {stable_mosaic.version = 11 : i64} {
  func.func @_fused_cal_kernel(%arg0: i32, %arg1: i32, %arg2: memref<8xi32, #tpu.memory_space<smem>>, %arg3: memref<8x16xf32, #tpu.memory_space<vmem>>, %arg4: memref<8x1xi32, #tpu.memory_space<vmem>>, %arg5: memref<8x16xf32, #tpu.memory_space<vmem>>, %arg6: memref<1x16xf32, #tpu.memory_space<vmem>>, %arg7: memref<16x16xf32, #tpu.memory_space<vmem>>, %arg8: memref<16x1xf32, #tpu.memory_space<vmem>>, %arg9: memref<1x1xf32, #tpu.memory_space<smem>>, %arg10: memref<1x16x16xf32, #tpu.memory_space<vmem>>, %arg11: memref<1x1xf32, #tpu.memory_space<smem>>, %arg12: memref<1x1xf32, #tpu.memory_space<smem>>, %arg13: memref<1x1xf32, #tpu.memory_space<smem>>, %arg14: memref<1x1xf32, #tpu.memory_space<smem>>, %arg15: memref<16x16xf32, #tpu.memory_space<vmem>>, %arg16: memref<8x16xf32, #tpu.memory_space<vmem>>, %arg17: memref<8x16xf32, #tpu.memory_space<vmem>>, %arg18: memref<16x16xf32, #tpu.memory_space<vmem>>, %arg19: memref<16x16xf32, #tpu.memory_space<vmem>>, %arg20: memref<16x1xf32, #tpu.memory_space<vmem>>, %arg21: memref<2xf32, #tpu.memory_space<smem>>) attributes {dimension_semantics = [#tpu.dimension_semantics<arbitrary>, #tpu.dimension_semantics<arbitrary>], iteration_bounds = array<i64: 1, 8>, scalar_prefetch = 1 : i64, scratch_operands = 6 : i64, tpu.core_type = #tpu.core_type<tc>, window_params = [{transform_indices = @transform_0, window_bounds = array<i64: 8, 16>}, {transform_indices = @transform_1, window_bounds = array<i64: 8, 1>}, {transform_indices = @transform_2, window_bounds = array<i64: 8, 16>}, {pipeline_mode = #tpu.pipeline_mode<synchronous>, transform_indices = @transform_3, window_bounds = array<i64: 1, 16>}, {pipeline_mode = #tpu.pipeline_mode<synchronous>, transform_indices = @transform_4, window_bounds = array<i64: 16, 16>}, {pipeline_mode = #tpu.pipeline_mode<synchronous>, transform_indices = @transform_5, window_bounds = array<i64: 16, 1>}, {transform_indices = @transform_6, window_bounds = array<i64: 1, 1>}, {transform_indices = @transform_7, window_bounds = array<i64: 1, 16, 16>}, {transform_indices = @transform_8, window_bounds = array<i64: 1, 1>}, {transform_indices = @transform_9, window_bounds = array<i64: 1, 1>}, {transform_indices = @transform_10, window_bounds = array<i64: 1, 1>}, {transform_indices = @transform_11, window_bounds = array<i64: 1, 1>}, {pipeline_mode = #tpu.pipeline_mode<synchronous>, transform_indices = @transform_12, window_bounds = array<i64: 16, 16>}]} {
    %c0_i32 = arith.constant 0 : i32
    %0 = arith.cmpi eq, %arg0, %c0_i32 : i32
    %c0_i32_0 = arith.constant 0 : i32
    %1 = arith.cmpi eq, %arg1, %c0_i32_0 : i32
    %2 = arith.andi %0, %1 : i1
    %3 = arith.extui %2 : i1 to i32
    %c0_i32_1 = arith.constant 0 : i32
    %4 = arith.cmpi ne, %3, %c0_i32_1 : i32
    scf.if %4 {
      %cst_27 = arith.constant 0.000000e+00 : f32
      %c0_28 = arith.constant 0 : index
      %52 = memref.load %arg21[%c0_28] : memref<2xf32, #tpu.memory_space<smem>>
      memref.store %cst_27, %arg21[%c0_28] : memref<2xf32, #tpu.memory_space<smem>>
      %cst_29 = arith.constant 0.000000e+00 : f32
      %c1 = arith.constant 1 : index
      %53 = memref.load %arg21[%c1] : memref<2xf32, #tpu.memory_space<smem>>
      memref.store %cst_29, %arg21[%c1] : memref<2xf32, #tpu.memory_space<smem>>
      %cst_30 = arith.constant 0.000000e+00 : f32
      %54 = vector.broadcast %cst_30 : f32 to vector<16x16xf32>
      %c0_31 = arith.constant 0 : index
      %c0_32 = arith.constant 0 : index
      %55 = vector.load %arg18[%c0_31, %c0_32] : memref<16x16xf32, #tpu.memory_space<vmem>>, vector<16x16xf32>
      tpu.vector_store %arg18[%c0_31, %c0_32], %54 {strides = array<i32>} : memref<16x16xf32, #tpu.memory_space<vmem>>, vector<16x16xf32>,
      %cst_33 = arith.constant 0.000000e+00 : f32
      %56 = vector.broadcast %cst_33 : f32 to vector<16x16xf32>
      %c0_34 = arith.constant 0 : index
      %c0_35 = arith.constant 0 : index
      %57 = vector.load %arg19[%c0_34, %c0_35] : memref<16x16xf32, #tpu.memory_space<vmem>>, vector<16x16xf32>
      tpu.vector_store %arg19[%c0_34, %c0_35], %56 {strides = array<i32>} : memref<16x16xf32, #tpu.memory_space<vmem>>, vector<16x16xf32>,
      %cst_36 = arith.constant 0.000000e+00 : f32
      %58 = vector.broadcast %cst_36 : f32 to vector<16x1xf32>
      %c0_37 = arith.constant 0 : index
      %c0_38 = arith.constant 0 : index
      %59 = vector.load %arg20[%c0_37, %c0_38] : memref<16x1xf32, #tpu.memory_space<vmem>>, vector<16x1xf32>
      tpu.vector_store %arg20[%c0_37, %c0_38], %58 {strides = array<i32>} : memref<16x1xf32, #tpu.memory_space<vmem>>, vector<16x1xf32>,
      %cst_39 = arith.constant 0.000000e+00 : f32
      %60 = vector.broadcast %cst_39 : f32 to vector<16x16xf32>
      %c0_40 = arith.constant 0 : index
      %c0_41 = arith.constant 0 : index
      %61 = vector.load %arg15[%c0_40, %c0_41] : memref<16x16xf32, #tpu.memory_space<vmem>>, vector<16x16xf32>
      tpu.vector_store %arg15[%c0_40, %c0_41], %60 {strides = array<i32>} : memref<16x16xf32, #tpu.memory_space<vmem>>, vector<16x16xf32>,
    } else {
    }
    %c0_i32_2 = arith.constant 0 : i32
    %5 = arith.cmpi eq, %arg1, %c0_i32_2 : i32
    %6 = arith.extui %5 : i1 to i32
    %c0_i32_3 = arith.constant 0 : i32
    %7 = arith.cmpi ne, %6, %c0_i32_3 : i32
    scf.if %7 {
      %52 = tpu.iota {dimensions = array<i32: 0>} : vector<8x1xi32>
      %c8_i32_27 = arith.constant 8 : i32
      %53 = arith.muli %arg0, %c8_i32_27 : i32
      %54 = vector.broadcast %53 : i32 to vector<8x1xi32>
      %55 = arith.addi %52, %54 : vector<8x1xi32>
      %c8_i32_28 = arith.constant 8 : i32
      %56 = vector.broadcast %c8_i32_28 : i32 to vector<8x1xi32>
      %57 = arith.cmpi slt, %55, %56 : vector<8x1xi32>
      %58 = arith.extui %57 : vector<8x1xi1> to vector<8x1xi32>
      %59 = arith.sitofp %58 : vector<8x1xi32> to vector<8x1xf32>
      %c0_29 = arith.constant 0 : index
      %c0_30 = arith.constant 0 : index
      %60 = vector.load %arg3[%c0_29, %c0_30] : memref<8x16xf32, #tpu.memory_space<vmem>>, vector<8x16xf32>
      %cst_31 = arith.constant dense<0xFF800000> : vector<8xf32>
      %61 = vector.multi_reduction <maximumf>, %60, %cst_31 [1] : vector<8x16xf32> to vector<8xf32>
      %62 = vector.shape_cast %61 : vector<8xf32> to vector<8x1xf32>
      %63 = vector.broadcast %62 : vector<8x1xf32> to vector<8x16xf32>
      %64 = arith.subf %60, %63 : vector<8x16xf32>
      %65 = math.exp %64 : vector<8x16xf32>
      %cst_32 = arith.constant dense<0.000000e+00> : vector<8xf32>
      %66 = vector.multi_reduction <add>, %65, %cst_32 [1] : vector<8x16xf32> to vector<8xf32>
      %67 = vector.shape_cast %66 : vector<8xf32> to vector<8x1xf32>
      %68 = vector.broadcast %67 : vector<8x1xf32> to vector<8x16xf32>
      %69 = arith.divf %65, %68 : vector<8x16xf32>
      %70 = tpu.iota {dimensions = array<i32: 1>} : vector<8x16xi32>
      %c0_33 = arith.constant 0 : index
      %c0_34 = arith.constant 0 : index
      %71 = vector.load %arg4[%c0_33, %c0_34] : memref<8x1xi32, #tpu.memory_space<vmem>>, vector<8x1xi32>
      %72 = vector.broadcast %71 : vector<8x1xi32> to vector<8x16xi32>
      %73 = arith.cmpi eq, %70, %72 : vector<8x16xi32>
      %74 = arith.extui %73 : vector<8x16xi1> to vector<8x16xi32>
      %75 = arith.sitofp %74 : vector<8x16xi32> to vector<8x16xf32>
      %c0_35 = arith.constant 0 : index
      %76 = memref.load %arg21[%c0_35] : memref<2xf32, #tpu.memory_space<smem>>
      %cst_36 = arith.constant 9.99999993E-9 : f32
      %77 = vector.broadcast %cst_36 : f32 to vector<8x16xf32>
      %78 = arith.addf %69, %77 : vector<8x16xf32>
      %79 = math.log %78 : vector<8x16xf32>
      %80 = arith.mulf %75, %79 : vector<8x16xf32>
      %cst_37 = arith.constant dense<0.000000e+00> : vector<8xf32>
      %81 = vector.multi_reduction <add>, %80, %cst_37 [1] : vector<8x16xf32> to vector<8xf32>
      %82 = vector.shape_cast %81 : vector<8xf32> to vector<8x1xf32>
      %83 = arith.mulf %59, %82 : vector<8x1xf32>
      %84 = vector.shape_cast %83 : vector<8x1xf32> to vector<1x8x1xf32>
      %cst_38 = arith.constant dense<0.000000e+00> : vector<1xf32>
      %85 = vector.multi_reduction <add>, %84, %cst_38 [1, 2] : vector<1x8x1xf32> to vector<1xf32>
      %86 = vector.shape_cast %85 : vector<1xf32> to vector<1x1x1xf32>
      %87 = vector.extract %86[0, 0, 0] : f32 from vector<1x1x1xf32>
      %88 = arith.addf %76, %87 : f32
      %c0_39 = arith.constant 0 : index
      %89 = memref.load %arg21[%c0_39] : memref<2xf32, #tpu.memory_space<smem>>
      memref.store %88, %arg21[%c0_39] : memref<2xf32, #tpu.memory_space<smem>>
      %c0_40 = arith.constant 0 : index
      %c0_41 = arith.constant 0 : index
      %90 = vector.load %arg5[%c0_40, %c0_41] : memref<8x16xf32, #tpu.memory_space<vmem>>, vector<8x16xf32>
      %cst_42 = arith.constant dense<0xFF800000> : vector<8xf32>
      %91 = vector.multi_reduction <maximumf>, %90, %cst_42 [1] : vector<8x16xf32> to vector<8xf32>
      %92 = vector.shape_cast %91 : vector<8xf32> to vector<8x1xf32>
      %93 = vector.broadcast %92 : vector<8x1xf32> to vector<8x16xf32>
      %94 = arith.subf %90, %93 : vector<8x16xf32>
      %95 = math.exp %94 : vector<8x16xf32>
      %cst_43 = arith.constant dense<0.000000e+00> : vector<8xf32>
      %96 = vector.multi_reduction <add>, %95, %cst_43 [1] : vector<8x16xf32> to vector<8xf32>
      %97 = vector.shape_cast %96 : vector<8xf32> to vector<8x1xf32>
      %98 = vector.broadcast %97 : vector<8x1xf32> to vector<8x16xf32>
      %99 = arith.divf %95, %98 : vector<8x16xf32>
      %c1 = arith.constant 1 : index
      %100 = memref.load %arg21[%c1] : memref<2xf32, #tpu.memory_space<smem>>
      %c0_44 = arith.constant 0 : index
      %c0_45 = arith.constant 0 : index
      %101 = vector.load %arg6[%c0_44, %c0_45] : memref<1x16xf32, #tpu.memory_space<vmem>>, vector<1x16xf32>
      %cst_46 = arith.constant 9.99999974E-6 : f32
      %102 = vector.broadcast %cst_46 : f32 to vector<8x16xf32>
      %103 = arith.addf %99, %102 : vector<8x16xf32>
      %104 = math.log %103 : vector<8x16xf32>
      %105 = vector.broadcast %101 : vector<1x16xf32> to vector<8x16xf32>
      %106 = arith.mulf %105, %104 : vector<8x16xf32>
      %cst_47 = arith.constant dense<0.000000e+00> : vector<8xf32>
      %107 = vector.multi_reduction <add>, %106, %cst_47 [1] : vector<8x16xf32> to vector<8xf32>
      %108 = vector.shape_cast %107 : vector<8xf32> to vector<8x1xf32>
      %109 = arith.mulf %59, %108 : vector<8x1xf32>
      %110 = vector.shape_cast %109 : vector<8x1xf32> to vector<1x8x1xf32>
      %cst_48 = arith.constant dense<0.000000e+00> : vector<1xf32>
      %111 = vector.multi_reduction <add>, %110, %cst_48 [1, 2] : vector<1x8x1xf32> to vector<1xf32>
      %112 = vector.shape_cast %111 : vector<1xf32> to vector<1x1x1xf32>
      %113 = vector.extract %112[0, 0, 0] : f32 from vector<1x1x1xf32>
      %114 = arith.addf %100, %113 : f32
      %c1_49 = arith.constant 1 : index
      %115 = memref.load %arg21[%c1_49] : memref<2xf32, #tpu.memory_space<smem>>
      memref.store %114, %arg21[%c1_49] : memref<2xf32, #tpu.memory_space<smem>>
      %cst_50 = arith.constant 9.99999974E-6 : f32
      %116 = vector.broadcast %cst_50 : f32 to vector<8x16xf32>
      %117 = arith.addf %69, %116 : vector<8x16xf32>
      %118 = math.log %117 : vector<8x16xf32>
      %cst_51 = arith.constant 0.000000e+00 : f32
      %119 = vector.broadcast %cst_51 : f32 to vector<8x16xf32>
      %120 = arith.subf %119, %118 : vector<8x16xf32>
      %c0_52 = arith.constant 0 : index
      %c0_53 = arith.constant 0 : index
      %121 = vector.load %arg16[%c0_52, %c0_53] : memref<8x16xf32, #tpu.memory_space<vmem>>, vector<8x16xf32>
      tpu.vector_store %arg16[%c0_52, %c0_53], %120 {strides = array<i32>} : memref<8x16xf32, #tpu.memory_space<vmem>>, vector<8x16xf32>,
    } else {
    }
    %c8_i32 = arith.constant 8 : i32
    %8 = arith.muli %arg0, %c8_i32 : i32
    %9 = arith.addi %8, %arg1 : i32
    %c8_i32_4 = arith.constant 8 : i32
    %10 = arith.cmpi slt, %9, %c8_i32_4 : i32
    %11 = arith.extui %10 : i1 to i32
    %12 = arith.sitofp %11 : i32 to f32
    %c0 = arith.constant 0 : index
    %c0_5 = arith.constant 0 : index
    %c0_6 = arith.constant 0 : index
    %13 = vector.load %arg10[%c0, %c0_5, %c0_6] : memref<1x16x16xf32, #tpu.memory_space<vmem>>, vector<1x16x16xf32>
    %14 = vector.shape_cast %13 : vector<1x16x16xf32> to vector<16x16xf32>
    %cst = arith.constant 0.000000e+00 : f32
    %15 = vector.broadcast %cst : f32 to vector<16x16xf32>
    %16 = arith.cmpf ogt, %14, %15 : vector<16x16xf32>
    %17 = arith.extui %16 : vector<16x16xi1> to vector<16x16xi32>
    %18 = arith.sitofp %17 : vector<16x16xi32> to vector<16x16xf32>
    %cst_7 = arith.constant dense<0.000000e+00> : vector<16xf32>
    %19 = vector.multi_reduction <add>, %18, %cst_7 [1] : vector<16x16xf32> to vector<16xf32>
    %20 = vector.shape_cast %19 : vector<16xf32> to vector<16x1xf32>
    %21 = vector.broadcast %12 : f32 to vector<16x1xf32>
    %22 = arith.mulf %20, %21 : vector<16x1xf32>
    %23 = arith.index_cast %arg1 : i32 to index
    %c0_8 = arith.constant 0 : index
    %24 = vector.load %arg16[%23, %c0_8] : memref<8x16xf32, #tpu.memory_space<vmem>>, vector<1x16xf32>
    %25 = vector.broadcast %22 : vector<16x1xf32> to vector<16x16xf32>
    %26 = arith.mulf %14, %25 : vector<16x16xf32>
    %c0_9 = arith.constant 0 : index
    %c0_10 = arith.constant 0 : index
    %27 = vector.load %arg18[%c0_9, %c0_10] : memref<16x16xf32, #tpu.memory_space<vmem>>, vector<16x16xf32>
    %28 = vector.broadcast %24 : vector<1x16xf32> to vector<16x16xf32>
    %29 = arith.mulf %26, %28 : vector<16x16xf32>
    %30 = arith.addf %27, %29 : vector<16x16xf32>
    %c0_11 = arith.constant 0 : index
    %c0_12 = arith.constant 0 : index
    %31 = vector.load %arg18[%c0_11, %c0_12] : memref<16x16xf32, #tpu.memory_space<vmem>>, vector<16x16xf32>
    tpu.vector_store %arg18[%c0_11, %c0_12], %30 {strides = array<i32>} : memref<16x16xf32, #tpu.memory_space<vmem>>, vector<16x16xf32>,
    %c0_13 = arith.constant 0 : index
    %c0_14 = arith.constant 0 : index
    %32 = vector.load %arg19[%c0_13, %c0_14] : memref<16x16xf32, #tpu.memory_space<vmem>>, vector<16x16xf32>
    %33 = arith.addf %32, %26 : vector<16x16xf32>
    %c0_15 = arith.constant 0 : index
    %c0_16 = arith.constant 0 : index
    %34 = vector.load %arg19[%c0_15, %c0_16] : memref<16x16xf32, #tpu.memory_space<vmem>>, vector<16x16xf32>
    tpu.vector_store %arg19[%c0_15, %c0_16], %33 {strides = array<i32>} : memref<16x16xf32, #tpu.memory_space<vmem>>, vector<16x16xf32>,
    %c0_17 = arith.constant 0 : index
    %c0_18 = arith.constant 0 : index
    %35 = vector.load %arg20[%c0_17, %c0_18] : memref<16x1xf32, #tpu.memory_space<vmem>>, vector<16x1xf32>
    %36 = arith.addf %35, %22 : vector<16x1xf32>
    %c0_19 = arith.constant 0 : index
    %c0_20 = arith.constant 0 : index
    %37 = vector.load %arg20[%c0_19, %c0_20] : memref<16x1xf32, #tpu.memory_space<vmem>>, vector<16x1xf32>
    tpu.vector_store %arg20[%c0_19, %c0_20], %36 {strides = array<i32>} : memref<16x1xf32, #tpu.memory_space<vmem>>, vector<16x1xf32>,
    %cst_21 = arith.constant dense<0.000000e+00> : vector<16xf32>
    %38 = vector.multi_reduction <add>, %18, %cst_21 [1] : vector<16x16xf32> to vector<16xf32>
    %39 = vector.broadcast %12 : f32 to vector<16xf32>
    %40 = arith.mulf %38, %39 : vector<16xf32>
    %41 = vector.shape_cast %40 : vector<16xf32> to vector<1x16xf32>
    %42 = arith.index_cast %arg1 : i32 to index
    %c0_22 = arith.constant 0 : index
    %43 = vector.load %arg17[%42, %c0_22] : memref<8x16xf32, #tpu.memory_space<vmem>>, vector<1x16xf32>
    tpu.vector_store %arg17[%42, %c0_22], %41 {strides = array<i32>} : memref<8x16xf32, #tpu.memory_space<vmem>>, vector<1x16xf32>,
    %c7_i32 = arith.constant 7 : i32
    %44 = arith.cmpi eq, %arg1, %c7_i32 : i32
    %45 = arith.extui %44 : i1 to i32
    %c0_i32_23 = arith.constant 0 : i32
    %46 = arith.cmpi ne, %45, %c0_i32_23 : i32
    scf.if %46 {
      %c0_27 = arith.constant 0 : index
      %c0_28 = arith.constant 0 : index
      %52 = vector.load %arg15[%c0_27, %c0_28] : memref<16x16xf32, #tpu.memory_space<vmem>>, vector<16x16xf32>
      %c0_29 = arith.constant 0 : index
      %c0_30 = arith.constant 0 : index
      %53 = vector.load %arg17[%c0_29, %c0_30] : memref<8x16xf32, #tpu.memory_space<vmem>>, vector<8x16xf32>
      %c0_31 = arith.constant 0 : index
      %c0_32 = arith.constant 0 : index
      %54 = vector.load %arg16[%c0_31, %c0_32] : memref<8x16xf32, #tpu.memory_space<vmem>>, vector<8x16xf32>
      %cst_33 = arith.constant dense<0.000000e+00> : vector<16x16xf32>
      %55 = tpu.matmul %53, %54, %cst_33 {dimension_numbers = #tpu.dot_dimension_numbers<[0], [0], [1], [1], [0, 1, 1, 1], [], []>} : vector<8x16xf32>, vector<8x16xf32>, vector<16x16xf32> -> vector<16x16xf32>
      %56 = arith.addf %52, %55 : vector<16x16xf32>
      %c0_34 = arith.constant 0 : index
      %c0_35 = arith.constant 0 : index
      %57 = vector.load %arg15[%c0_34, %c0_35] : memref<16x16xf32, #tpu.memory_space<vmem>>, vector<16x16xf32>
      tpu.vector_store %arg15[%c0_34, %c0_35], %56 {strides = array<i32>} : memref<16x16xf32, #tpu.memory_space<vmem>>, vector<16x16xf32>,
    } else {
    }
    %c0_i32_24 = arith.constant 0 : i32
    %47 = arith.cmpi eq, %arg0, %c0_i32_24 : i32
    %c7_i32_25 = arith.constant 7 : i32
    %48 = arith.cmpi eq, %arg1, %c7_i32_25 : i32
    %49 = arith.andi %47, %48 : i1
    %50 = arith.extui %49 : i1 to i32
    %c0_i32_26 = arith.constant 0 : i32
    %51 = arith.cmpi ne, %50, %c0_i32_26 : i32
    scf.if %51 {
      %c0_27 = arith.constant 0 : index
      %52 = memref.load %arg21[%c0_27] : memref<2xf32, #tpu.memory_space<smem>>
      %cst_28 = arith.constant 0.000000e+00 : f32
      %53 = arith.subf %cst_28, %52 : f32
      %cst_29 = arith.constant 8.000000e+00 : f32
      %54 = arith.divf %53, %cst_29 : f32
      %c1 = arith.constant 1 : index
      %55 = memref.load %arg21[%c1] : memref<2xf32, #tpu.memory_space<smem>>
      %cst_30 = arith.constant 0.000000e+00 : f32
      %56 = arith.subf %cst_30, %55 : f32
      %cst_31 = arith.constant 8.000000e+00 : f32
      %57 = arith.divf %56, %cst_31 : f32
      %c0_32 = arith.constant 0 : index
      %c0_33 = arith.constant 0 : index
      %58 = vector.load %arg20[%c0_32, %c0_33] : memref<16x1xf32, #tpu.memory_space<vmem>>, vector<16x1xf32>
      %cst_34 = arith.constant 0.000000e+00 : f32
      %59 = vector.broadcast %cst_34 : f32 to vector<16x1xf32>
      %60 = arith.cmpf oeq, %58, %59 : vector<16x1xf32>
      %cst_35 = arith.constant 1.000000e+00 : f32
      %61 = vector.broadcast %cst_35 : f32 to vector<16x1xf32>
      %62 = arith.select %60, %61, %58 : vector<16x1xi1>, vector<16x1xf32>
      %c0_36 = arith.constant 0 : index
      %c0_37 = arith.constant 0 : index
      %63 = vector.load %arg8[%c0_36, %c0_37] : memref<16x1xf32, #tpu.memory_space<vmem>>, vector<16x1xf32>
      %64 = arith.divf %63, %62 : vector<16x1xf32>
      %c0_38 = arith.constant 0 : index
      %c0_39 = arith.constant 0 : index
      %65 = vector.load %arg18[%c0_38, %c0_39] : memref<16x16xf32, #tpu.memory_space<vmem>>, vector<16x16xf32>
      %c0_40 = arith.constant 0 : index
      %c0_41 = arith.constant 0 : index
      %66 = vector.load %arg7[%c0_40, %c0_41] : memref<16x16xf32, #tpu.memory_space<vmem>>, vector<16x16xf32>
      %c0_42 = arith.constant 0 : index
      %c0_43 = arith.constant 0 : index
      %67 = vector.load %arg19[%c0_42, %c0_43] : memref<16x16xf32, #tpu.memory_space<vmem>>, vector<16x16xf32>
      %68 = arith.mulf %66, %67 : vector<16x16xf32>
      %69 = arith.subf %65, %68 : vector<16x16xf32>
      %70 = vector.broadcast %64 : vector<16x1xf32> to vector<16x16xf32>
      %71 = arith.mulf %70, %69 : vector<16x16xf32>
      %72 = vector.shape_cast %71 : vector<16x16xf32> to vector<1x16x16xf32>
      %cst_44 = arith.constant dense<0.000000e+00> : vector<1xf32>
      %73 = vector.multi_reduction <add>, %72, %cst_44 [1, 2] : vector<1x16x16xf32> to vector<1xf32>
      %74 = vector.shape_cast %73 : vector<1xf32> to vector<1x1x1xf32>
      %75 = vector.extract %74[0, 0, 0] : f32 from vector<1x1x1xf32>
      %c0_45 = arith.constant 0 : index
      %c0_46 = arith.constant 0 : index
      %76 = memref.load %arg12[%c0_45, %c0_46] : memref<1x1xf32, #tpu.memory_space<smem>>
      memref.store %54, %arg12[%c0_45, %c0_46] : memref<1x1xf32, #tpu.memory_space<smem>>
      %c0_47 = arith.constant 0 : index
      %c0_48 = arith.constant 0 : index
      %77 = memref.load %arg13[%c0_47, %c0_48] : memref<1x1xf32, #tpu.memory_space<smem>>
      memref.store %57, %arg13[%c0_47, %c0_48] : memref<1x1xf32, #tpu.memory_space<smem>>
      %c0_49 = arith.constant 0 : index
      %c0_50 = arith.constant 0 : index
      %78 = memref.load %arg14[%c0_49, %c0_50] : memref<1x1xf32, #tpu.memory_space<smem>>
      memref.store %75, %arg14[%c0_49, %c0_50] : memref<1x1xf32, #tpu.memory_space<smem>>
      %c0_51 = arith.constant 0 : index
      %c0_52 = arith.constant 0 : index
      %79 = memref.load %arg9[%c0_51, %c0_52] : memref<1x1xf32, #tpu.memory_space<smem>>
      %80 = arith.mulf %79, %57 : f32
      %81 = arith.subf %54, %80 : f32
      %82 = arith.subf %81, %75 : f32
      %c0_53 = arith.constant 0 : index
      %c0_54 = arith.constant 0 : index
      %83 = memref.load %arg11[%c0_53, %c0_54] : memref<1x1xf32, #tpu.memory_space<smem>>
      memref.store %82, %arg11[%c0_53, %c0_54] : memref<1x1xf32, #tpu.memory_space<smem>>
    } else {
    }
    return
  }
  func.func @transform_0(%arg0: i32, %arg1: i32, %arg2: memref<8xi32, #tpu.memory_space<smem>>) -> (i32, i32) {
    %c0_i32 = arith.constant 0 : i32
    %c0_i32_0 = arith.constant 0 : i32
    return %arg0, %c0_i32 : i32, i32
  }
  func.func @transform_1(%arg0: i32, %arg1: i32, %arg2: memref<8xi32, #tpu.memory_space<smem>>) -> (i32, i32) {
    %c0_i32 = arith.constant 0 : i32
    %c0_i32_0 = arith.constant 0 : i32
    return %arg0, %c0_i32 : i32, i32
  }
  func.func @transform_2(%arg0: i32, %arg1: i32, %arg2: memref<8xi32, #tpu.memory_space<smem>>) -> (i32, i32) {
    %c0_i32 = arith.constant 0 : i32
    %c0_i32_0 = arith.constant 0 : i32
    return %arg0, %c0_i32 : i32, i32
  }
  func.func @transform_3(%arg0: i32, %arg1: i32, %arg2: memref<8xi32, #tpu.memory_space<smem>>) -> (i32, i32) {
    %c0_i32 = arith.constant 0 : i32
    %c0_i32_0 = arith.constant 0 : i32
    %c0_i32_1 = arith.constant 0 : i32
    return %c0_i32, %c0_i32_0 : i32, i32
  }
  func.func @transform_4(%arg0: i32, %arg1: i32, %arg2: memref<8xi32, #tpu.memory_space<smem>>) -> (i32, i32) {
    %c0_i32 = arith.constant 0 : i32
    %c0_i32_0 = arith.constant 0 : i32
    %c0_i32_1 = arith.constant 0 : i32
    return %c0_i32, %c0_i32_0 : i32, i32
  }
  func.func @transform_5(%arg0: i32, %arg1: i32, %arg2: memref<8xi32, #tpu.memory_space<smem>>) -> (i32, i32) {
    %c0_i32 = arith.constant 0 : i32
    %c0_i32_0 = arith.constant 0 : i32
    %c0_i32_1 = arith.constant 0 : i32
    return %c0_i32, %c0_i32_0 : i32, i32
  }
  func.func @transform_6(%arg0: i32, %arg1: i32, %arg2: memref<8xi32, #tpu.memory_space<smem>>) -> (i32, i32) {
    %c0_i32 = arith.constant 0 : i32
    %c0_i32_0 = arith.constant 0 : i32
    %c0_i32_1 = arith.constant 0 : i32
    return %c0_i32, %c0_i32_0 : i32, i32
  }
  func.func @transform_7(%arg0: i32, %arg1: i32, %arg2: memref<8xi32, #tpu.memory_space<smem>>) -> (i32, i32, i32) {
    %c8_i32 = arith.constant 8 : i32
    %0 = arith.muli %arg0, %c8_i32 : i32
    %1 = arith.addi %0, %arg1 : i32
    %2 = arith.index_cast %1 : i32 to index
    %3 = memref.load %arg2[%2] : memref<8xi32, #tpu.memory_space<smem>>
    %c0_i32 = arith.constant 0 : i32
    %c0_i32_0 = arith.constant 0 : i32
    %c0_i32_1 = arith.constant 0 : i32
    return %3, %c0_i32, %c0_i32_0 : i32, i32, i32
  }
  func.func @transform_8(%arg0: i32, %arg1: i32, %arg2: memref<8xi32, #tpu.memory_space<smem>>) -> (i32, i32) {
    %c0_i32 = arith.constant 0 : i32
    %c0_i32_0 = arith.constant 0 : i32
    %c0_i32_1 = arith.constant 0 : i32
    return %c0_i32, %c0_i32_0 : i32, i32
  }
  func.func @transform_9(%arg0: i32, %arg1: i32, %arg2: memref<8xi32, #tpu.memory_space<smem>>) -> (i32, i32) {
    %c0_i32 = arith.constant 0 : i32
    %c0_i32_0 = arith.constant 0 : i32
    %c0_i32_1 = arith.constant 0 : i32
    return %c0_i32, %c0_i32_0 : i32, i32
  }
  func.func @transform_10(%arg0: i32, %arg1: i32, %arg2: memref<8xi32, #tpu.memory_space<smem>>) -> (i32, i32) {
    %c0_i32 = arith.constant 0 : i32
    %c0_i32_0 = arith.constant 0 : i32
    %c0_i32_1 = arith.constant 0 : i32
    return %c0_i32, %c0_i32_0 : i32, i32
  }
  func.func @transform_11(%arg0: i32, %arg1: i32, %arg2: memref<8xi32, #tpu.memory_space<smem>>) -> (i32, i32) {
    %c0_i32 = arith.constant 0 : i32
    %c0_i32_0 = arith.constant 0 : i32
    %c0_i32_1 = arith.constant 0 : i32
    return %c0_i32, %c0_i32_0 : i32, i32
  }
  func.func @transform_12(%arg0: i32, %arg1: i32, %arg2: memref<8xi32, #tpu.memory_space<smem>>) -> (i32, i32) {
    %c0_i32 = arith.constant 0 : i32
    %c0_i32_0 = arith.constant 0 : i32
    %c0_i32_1 = arith.constant 0 : i32
    return %c0_i32, %c0_i32_0 : i32, i32
  }
}

</mosaic_0001>

<llo_original>
// kernel: tpu_custom_call.1
$region0: #{tpu_custom_call.1}
  #allocation0 [shape = 'u32[]', space=smem, size = 0x4, offset = 0x4, fixed_abs, tag = 'smem constant byte address 0x4 - core index']
  #allocation1 [shape = 'u32[144,128]{1,0:T(1,128)}', space=vmem, size = 0x12000, scoped, tag = 'internal scratch']
  #allocation2 [shape = 'f32[8,16]{1,0:T(8,128)}', space=vmem, size = 0x1000, scoped, tag = 'scratch operand']
  #allocation3 [shape = 'f32[8,16]{1,0:T(8,128)}', space=vmem, size = 0x1000, scoped, tag = 'scratch operand']
  #allocation4 [shape = 'f32[16,16]{1,0:T(8,128)}', space=vmem, size = 0x2000, scoped, tag = 'scratch operand']
  #allocation5 [shape = 'f32[16,16]{1,0:T(8,128)}', space=vmem, size = 0x2000, scoped, tag = 'scratch operand']
  #allocation6 [shape = 'f32[16,1]{1,0:T(8,128)}', space=vmem, size = 0x2000, scoped, tag = 'scratch operand']
  #allocation7 [shape = 'f32[2]{0:T(128)}', space=smem, size = 0x200, scoped, tag = 'scratch operand']
  #allocation8 [shape = 's32[1]{0}', space=sflag, size = 0x4, scoped, tag = 'scoped memory for tpu_custom_call.1']
  #allocation9 [shape = 'u8[512]{0}', space=smem, size = 0x200, scoped, tag = 'prefetched SMEM operand 0']
  #allocation10 [shape = 'f32[1,1]{1,0:T(1,128)S(6)}', space=smem, size = 0x200, scoped, tag = 'scoped memory for tpu_custom_call.1']
  %s0 = inlined_call_operand.vmem [shape: s32[8], index: 0, kind: input, shape index: {}]
  %s1 = inlined_call_operand.vmem [shape: f32[8,16], index: 1, kind: input, shape index: {}]
  %s2 = inlined_call_operand.vmem [shape: s32[8,1], index: 2, kind: input, shape index: {}]
  %s3 = inlined_call_operand.vmem [shape: f32[8,16], index: 3, kind: input, shape index: {}]
  %s4 = inlined_call_operand.vmem [shape: f32[1,16], index: 4, kind: input, shape index: {}]
  %s5 = inlined_call_operand.vmem [shape: f32[16,16], index: 5, kind: input, shape index: {}]
  %s6 = inlined_call_operand.vmem [shape: f32[16,1], index: 6, kind: input, shape index: {}]
  %s7 = inlined_call_operand.<no memory space> [shape: f32[1,1], index: 7, kind: input, shape index: {}]
  %s8 = inlined_call_operand.vmem [shape: f32[32,16,16], index: 8, kind: input, shape index: {}]
  %s9 = inlined_call_operand.hbm [shape: f32[1,1], index: 9, kind: output, shape index: {0}]
  %s10 = inlined_call_operand.hbm [shape: f32[1,1], index: 10, kind: output, shape index: {1}]
  %s11 = inlined_call_operand.hbm [shape: f32[1,1], index: 11, kind: output, shape index: {2}]
  %s12 = inlined_call_operand.hbm [shape: f32[1,1], index: 12, kind: output, shape index: {3}]
  %s13 = inlined_call_operand.hbm [shape: f32[16,16], index: 13, kind: output, shape index: {4}]
  %14 = xla_tuple %s9, %s10, %s11, %s12, %s13
  %s15 = sld [smem:[#allocation0]]
  $region113: #{tpu_custom_call.1} parent=0
    _
  %s17 = ssub.s32 1, %s15
  %s18 = scalar_select 0, %s17, %s15
  %s19 = sshll.u32 %s0, 4
  %s20 = int_to_ptr.vmem [resolvable:$true] %s19
  %22 = dma.vmem_to_smem %s20, 16, [#allocation9], [#allocation8]
  %23 = sst [smem:[#allocation10]] %s7
  %24 = dma.done [#allocation8], 16
  %25 = sfence
  $region1: #{tpu_custom_call.1} parent=0
    #allocation11 [shape = 'u8[512]{0}', space=smem, size = 0x200, scoped, tag = 'output window, operand 0, single buffered']
    #allocation12 [shape = 's32[2]{0}', space=sflag, size = 0x8, scoped, tag = 'scoped memory for tpu_custom_call.1']
    #allocation13 [shape = 's32[2]{0}', space=sflag, size = 0x8, scoped, tag = 'scoped memory for tpu_custom_call.1']
    #allocation14 [shape = 'u8[512]{0}', space=smem, size = 0x200, scoped, tag = 'output window, operand 1, single buffered']
    #allocation15 [shape = 's32[1]{0}', space=sflag, size = 0x4, scoped, tag = 'scoped memory for tpu_custom_call.1']
    #allocation16 [shape = 'u8[512]{0}', space=smem, size = 0x200, scoped, tag = 'output window, operand 2, single buffered']
    #allocation17 [shape = 'u8[512]{0}', space=smem, size = 0x200, scoped, tag = 'output window, operand 3, single buffered']
    #allocation18 [shape = 's32[1]{0}', space=sflag, size = 0x4, scoped, tag = 'scoped memory for tpu_custom_call.1']
    #allocation19 [shape = 'u8[8192]{0}', space=vmem, size = 0x2000, scoped, tag = 'output window, operand 4, single buffered']
    %26 = vsyncpa [#allocation13], 0
    %27 = vsyncpa [#allocation15], 0
    %28 = vsyncpa [#allocation18], 0
    %29 = vsyncpa [#allocation12], 0
    loop: start=0, step=1, limit=10
    $region2: #{tpu_custom_call.1} parent=1 // loop_pre_header
      _
    $region3: #{tpu_custom_call.1} parent=1 // loop_header
      %s31 = sphi 0, %s35
      %p32 = scmp.ge.s32.totalorder %s31, 10
      %s38 = sphi 0, %s50
      %s39 = sphi 0, %s46
      %s40 = sphi 0, %s38
      %s41 = sphi 0, %s39
      %s42 = sphi 0, %s40
      %s43 = sphi 0, %s41
      %s53 = sphi 0, %s55
      %s56 = sphi 0, %s53
      %s57 = sphi 0, %s56
      %s73 = sphi 0, %s57
      %s79 = sphi 0, %s81
      %s82 = sphi 0, %s79
      %s83 = sphi 0, %s82
      %s99 = sphi 0, %s83
      %s105 = sphi 0, %s107
      %s108 = sphi 0, %s105
      %s109 = sphi 0, %s108
      %s125 = sphi 0, %s109
      %s129 = sphi 0, %s129
      %s131 = sphi 0, %s129
      %s132 = sphi 0, %s131
      %s146 = sphi 0, %s132
      %s150 = sphi 0, %s150
      %s152 = sphi 0, %s150
      %s153 = sphi 0, %s152
      %s167 = sphi 0, %s153
      %s171 = sphi 0, %s171
      %s173 = sphi 0, %s171
      %s174 = sphi 0, %s173
      %s188 = sphi 0, %s174
      %s192 = sphi 0, %s192
      %s194 = sphi 0, %s192
      %s195 = sphi 0, %s194
      %s209 = sphi 0, %s195
      %s221 = sphi 0, %s223
      %s224 = sphi 0, %s221
      %s225 = sphi 0, %s224
      %s241 = sphi 0, %s225
      %s245 = sphi 0, %s245
      %s247 = sphi 0, %s245
      %s248 = sphi 0, %s247
      %s262 = sphi 0, %s248
      %s266 = sphi 0, %s266
      %s268 = sphi 0, %s266
      %s269 = sphi 0, %s268
      %s283 = sphi 0, %s269
      %s287 = sphi 0, %s287
      %s289 = sphi 0, %s287
      %s290 = sphi 0, %s289
      %s304 = sphi 0, %s290
      %s308 = sphi 0, %s308
      %s310 = sphi 0, %s308
      %s311 = sphi 0, %s310
      %s325 = sphi 0, %s311
      %s329 = sphi 0, %s329
      %s331 = sphi 0, %s329
      %s332 = sphi 0, %s331
      %s346 = sphi 0, %s332
    $region4: #{tpu_custom_call.1} parent=1 // loop_header_branch
      %34 = sbr.rel (%p32) target = $region8
    $region5: #{tpu_custom_call.1} parent=1 // loop_body
      %s36 = ssub.s32 %s31, 1
      %s37 = ssub.s32 %s31, 2
      %s44 = sadd.s32 1, %s39
      %p45 = scmp.ge.s32.totalorder %s44, 8
      %s46 = scalar_select %p45, 0, %s44
      %s47 = sadd.s32 1, %s38
      %s48 = scalar_select %p45, %s47, %s38
      %p49 = scmp.ge.s32.totalorder %s48, 1
      %s50 = scalar_select %p49, 0, %s48
      %s51 = ssub.s32 %s38, %s50
      %p52 = scmp.eq.s32.totalorder %s51, 0
      %s54 = sadd.s32 %s53, 1
      %s55 = scalar_select %p52, %s53, %s54
      %p58 = pneg %p52
      %p59 = scmp.eq.s32.totalorder %s31, 7
      %p60 = por %p58, %p59
      %p61 = scmp.ne.s32.totalorder %s53, %s56
      %p62 = scmp.eq.s32.totalorder %s31, 0
      %p63 = por %p61, %p62
      %p64 = scmp.ne.s32.totalorder %s53, %s56
      %p65 = scmp.eq.s32.totalorder %s36, 7
      %p66 = por %p64, %p65
      %p67 = scmp.ne.s32.totalorder %s56, %s57
      %p68 = scmp.eq.s32.totalorder %s36, 0
      %p69 = por %p67, %p68
      %p70 = scmp.ne.s32.totalorder %s56, %s57
      %p71 = scmp.eq.s32.totalorder %s37, 7
      %p72 = por %p70, %p71
      %p74 = scmp.ne.s32.totalorder %s57, %s73
      %p75 = scmp.eq.s32.totalorder %s37, 0
      %p76 = por %p74, %p75
      %s77 = ssub.s32 %s38, %s50
      %p78 = scmp.eq.s32.totalorder %s77, 0
      %s80 = sadd.s32 %s79, 1
      %s81 = scalar_select %p78, %s79, %s80
      %p84 = pneg %p78
      %p85 = scmp.eq.s32.totalorder %s31, 7
      %p86 = por %p84, %p85
      %p87 = scmp.ne.s32.totalorder %s79, %s82
      %p88 = scmp.eq.s32.totalorder %s31, 0
      %p89 = por %p87, %p88
      %p90 = scmp.ne.s32.totalorder %s79, %s82
      %p91 = scmp.eq.s32.totalorder %s36, 7
      %p92 = por %p90, %p91
      %p93 = scmp.ne.s32.totalorder %s82, %s83
      %p94 = scmp.eq.s32.totalorder %s36, 0
      %p95 = por %p93, %p94
      %p96 = scmp.ne.s32.totalorder %s82, %s83
      %p97 = scmp.eq.s32.totalorder %s37, 7
      %p98 = por %p96, %p97
      %p100 = scmp.ne.s32.totalorder %s83, %s99
      %p101 = scmp.eq.s32.totalorder %s37, 0
      %p102 = por %p100, %p101
      %s103 = ssub.s32 %s38, %s50
      %p104 = scmp.eq.s32.totalorder %s103, 0
      %s106 = sadd.s32 %s105, 1
      %s107 = scalar_select %p104, %s105, %s106
      %p110 = pneg %p104
      %p111 = scmp.eq.s32.totalorder %s31, 7
      %p112 = por %p110, %p111
      %p113 = scmp.ne.s32.totalorder %s105, %s108
      %p114 = scmp.eq.s32.totalorder %s31, 0
      %p115 = por %p113, %p114
      %p116 = scmp.ne.s32.totalorder %s105, %s108
      %p117 = scmp.eq.s32.totalorder %s36, 7
      %p118 = por %p116, %p117
      %p119 = scmp.ne.s32.totalorder %s108, %s109
      %p120 = scmp.eq.s32.totalorder %s36, 0
      %p121 = por %p119, %p120
      %p122 = scmp.ne.s32.totalorder %s108, %s109
      %p123 = scmp.eq.s32.totalorder %s37, 7
      %p124 = por %p122, %p123
      %p126 = scmp.ne.s32.totalorder %s109, %s125
      %p127 = scmp.eq.s32.totalorder %s37, 0
      %p128 = por %p126, %p127
      %s130 = sadd.s32 %s129, 1
      %p133 = scmp.eq.s32.totalorder %s31, 7
      %p134 = scmp.ne.s32.totalorder %s129, %s131
      %p135 = scmp.eq.s32.totalorder %s31, 0
      %p136 = por %p134, %p135
      %p137 = scmp.ne.s32.totalorder %s129, %s131
      %p138 = scmp.eq.s32.totalorder %s36, 7
      %p139 = por %p137, %p138
      %p140 = scmp.ne.s32.totalorder %s131, %s132
      %p141 = scmp.eq.s32.totalorder %s36, 0
      %p142 = por %p140, %p141
      %p143 = scmp.ne.s32.totalorder %s131, %s132
      %p144 = scmp.eq.s32.totalorder %s37, 7
      %p145 = por %p143, %p144
      %p147 = scmp.ne.s32.totalorder %s132, %s146
      %p148 = scmp.eq.s32.totalorder %s37, 0
      %p149 = por %p147, %p148
      %s151 = sadd.s32 %s150, 1
      %p154 = scmp.eq.s32.totalorder %s31, 7
      %p155 = scmp.ne.s32.totalorder %s150, %s152
      %p156 = scmp.eq.s32.totalorder %s31, 0
      %p157 = por %p155, %p156
      %p158 = scmp.ne.s32.totalorder %s150, %s152
      %p159 = scmp.eq.s32.totalorder %s36, 7
      %p160 = por %p158, %p159
      %p161 = scmp.ne.s32.totalorder %s152, %s153
      %p162 = scmp.eq.s32.totalorder %s36, 0
      %p163 = por %p161, %p162
      %p164 = scmp.ne.s32.totalorder %s152, %s153
      %p165 = scmp.eq.s32.totalorder %s37, 7
      %p166 = por %p164, %p165
      %p168 = scmp.ne.s32.totalorder %s153, %s167
      %p169 = scmp.eq.s32.totalorder %s37, 0
      %p170 = por %p168, %p169
      %s172 = sadd.s32 %s171, 1
      %p175 = scmp.eq.s32.totalorder %s31, 7
      %p176 = scmp.ne.s32.totalorder %s171, %s173
      %p177 = scmp.eq.s32.totalorder %s31, 0
      %p178 = por %p176, %p177
      %p179 = scmp.ne.s32.totalorder %s171, %s173
      %p180 = scmp.eq.s32.totalorder %s36, 7
      %p181 = por %p179, %p180
      %p182 = scmp.ne.s32.totalorder %s173, %s174
      %p183 = scmp.eq.s32.totalorder %s36, 0
      %p184 = por %p182, %p183
      %p185 = scmp.ne.s32.totalorder %s173, %s174
      %p186 = scmp.eq.s32.totalorder %s37, 7
      %p187 = por %p185, %p186
      %p189 = scmp.ne.s32.totalorder %s174, %s188
      %p190 = scmp.eq.s32.totalorder %s37, 0
      %p191 = por %p189, %p190
      %s193 = sadd.s32 %s192, 1
      %p196 = scmp.eq.s32.totalorder %s31, 7
      %p197 = scmp.ne.s32.totalorder %s192, %s194
      %p198 = scmp.eq.s32.totalorder %s31, 0
      %p199 = por %p197, %p198
      %p200 = scmp.ne.s32.totalorder %s192, %s194
      %p201 = scmp.eq.s32.totalorder %s36, 7
      %p202 = por %p200, %p201
      %p203 = scmp.ne.s32.totalorder %s194, %s195
      %p204 = scmp.eq.s32.totalorder %s36, 0
      %p205 = por %p203, %p204
      %p206 = scmp.ne.s32.totalorder %s194, %s195
      %p207 = scmp.eq.s32.totalorder %s37, 7
      %p208 = por %p206, %p207
      %p210 = scmp.ne.s32.totalorder %s195, %s209
      %p211 = scmp.eq.s32.totalorder %s37, 0
      %p212 = por %p210, %p211
      %s213 = smul.u32 %s38, 8
      %s214 = sadd.s32 %s213, %s39
      %s215 = sld [smem:[#allocation9 + %s214]]
      %s216 = smul.u32 %s50, 8
      %s217 = sadd.s32 %s216, %s46
      %s218 = sld [smem:[#allocation9 + %s217]]
      %s219 = ssub.s32 %s215, %s218
      %p220 = scmp.eq.s32.totalorder %s219, 0
      %s222 = sadd.s32 %s221, 1
      %s223 = scalar_select %p220, %s221, %s222
      %p226 = pneg %p220
      %p227 = scmp.eq.s32.totalorder %s31, 7
      %p228 = por %p226, %p227
      %p229 = scmp.ne.s32.totalorder %s221, %s224
      %p230 = scmp.eq.s32.totalorder %s31, 0
      %p231 = por %p229, %p230
      %p232 = scmp.ne.s32.totalorder %s221, %s224
      %p233 = scmp.eq.s32.totalorder %s36, 7
      %p234 = por %p232, %p233
      %p235 = scmp.ne.s32.totalorder %s224, %s225
      %p236 = scmp.eq.s32.totalorder %s36, 0
      %p237 = por %p235, %p236
      %p238 = scmp.ne.s32.totalorder %s224, %s225
      %p239 = scmp.eq.s32.totalorder %s37, 7
      %p240 = por %p238, %p239
      %p242 = scmp.ne.s32.totalorder %s225, %s241
      %p243 = scmp.eq.s32.totalorder %s37, 0
      %p244 = por %p242, %p243
      %s246 = sadd.s32 %s245, 1
      %p249 = scmp.eq.s32.totalorder %s31, 7
      %p250 = scmp.ne.s32.totalorder %s245, %s247
      %p251 = scmp.eq.s32.totalorder %s31, 0
      %p252 = por %p250, %p251
      %p253 = scmp.ne.s32.totalorder %s245, %s247
      %p254 = scmp.eq.s32.totalorder %s36, 7
      %p255 = por %p253, %p254
      %p256 = scmp.ne.s32.totalorder %s247, %s248
      %p257 = scmp.eq.s32.totalorder %s36, 0
      %p258 = por %p256, %p257
      %p259 = scmp.ne.s32.totalorder %s247, %s248
      %p260 = scmp.eq.s32.totalorder %s37, 7
      %p261 = por %p259, %p260
      %p263 = scmp.ne.s32.totalorder %s248, %s262
      %p264 = scmp.eq.s32.totalorder %s37, 0
      %p265 = por %p263, %p264
      %s267 = sadd.s32 %s266, 1
      %p270 = scmp.eq.s32.totalorder %s31, 7
      %p271 = scmp.ne.s32.totalorder %s266, %s268
      %p272 = scmp.eq.s32.totalorder %s31, 0
      %p273 = por %p271, %p272
      %p274 = scmp.ne.s32.totalorder %s266, %s268
      %p275 = scmp.eq.s32.totalorder %s36, 7
      %p276 = por %p274, %p275
      %p277 = scmp.ne.s32.totalorder %s268, %s269
      %p278 = scmp.eq.s32.totalorder %s36, 0
      %p279 = por %p277, %p278
      %p280 = scmp.ne.s32.totalorder %s268, %s269
      %p281 = scmp.eq.s32.totalorder %s37, 7
      %p282 = por %p280, %p281
      %p284 = scmp.ne.s32.totalorder %s269, %s283
      %p285 = scmp.eq.s32.totalorder %s37, 0
      %p286 = por %p284, %p285
      %s288 = sadd.s32 %s287, 1
      %p291 = scmp.eq.s32.totalorder %s31, 7
      %p292 = scmp.ne.s32.totalorder %s287, %s289
      %p293 = scmp.eq.s32.totalorder %s31, 0
      %p294 = por %p292, %p293
      %p295 = scmp.ne.s32.totalorder %s287, %s289
      %p296 = scmp.eq.s32.totalorder %s36, 7
      %p297 = por %p295, %p296
      %p298 = scmp.ne.s32.totalorder %s289, %s290
      %p299 = scmp.eq.s32.totalorder %s36, 0
      %p300 = por %p298, %p299
      %p301 = scmp.ne.s32.totalorder %s289, %s290
      %p302 = scmp.eq.s32.totalorder %s37, 7
      %p303 = por %p301, %p302
      %p305 = scmp.ne.s32.totalorder %s290, %s304
      %p306 = scmp.eq.s32.totalorder %s37, 0
      %p307 = por %p305, %p306
      %s309 = sadd.s32 %s308, 1
      %p312 = scmp.eq.s32.totalorder %s31, 7
      %p313 = scmp.ne.s32.totalorder %s308, %s310
      %p314 = scmp.eq.s32.totalorder %s31, 0
      %p315 = por %p313, %p314
      %p316 = scmp.ne.s32.totalorder %s308, %s310
      %p317 = scmp.eq.s32.totalorder %s36, 7
      %p318 = por %p316, %p317
      %p319 = scmp.ne.s32.totalorder %s310, %s311
      %p320 = scmp.eq.s32.totalorder %s36, 0
      %p321 = por %p319, %p320
      %p322 = scmp.ne.s32.totalorder %s310, %s311
      %p323 = scmp.eq.s32.totalorder %s37, 7
      %p324 = por %p322, %p323
      %p326 = scmp.ne.s32.totalorder %s311, %s325
      %p327 = scmp.eq.s32.totalorder %s37, 0
      %p328 = por %p326, %p327
      %s330 = sadd.s32 %s329, 1
      %p333 = scmp.eq.s32.totalorder %s31, 7
      %p334 = scmp.ne.s32.totalorder %s329, %s331
      %p335 = scmp.eq.s32.totalorder %s31, 0
      %p336 = por %p334, %p335
      %p337 = scmp.ne.s32.totalorder %s329, %s331
      %p338 = scmp.eq.s32.totalorder %s36, 7
      %p339 = por %p337, %p338
      %p340 = scmp.ne.s32.totalorder %s331, %s332
      %p341 = scmp.eq.s32.totalorder %s36, 0
      %p342 = por %p340, %p341
      %p343 = scmp.ne.s32.totalorder %s331, %s332
      %p344 = scmp.eq.s32.totalorder %s37, 7
      %p345 = por %p343, %p344
      %p347 = scmp.ne.s32.totalorder %s332, %s346
      %p348 = scmp.eq.s32.totalorder %s37, 0
      %p349 = por %p347, %p348
      %p350 = scmp.le.s32.totalorder 1, %s31
      %p351 = scmp.lt.s32.totalorder %s31, 9
      %p352 = pnand %p350, %p351
      %p353 = pneg %p352
      // Predicated region
      $region9: #{tpu_custom_call.1} parent=5 // pred_check
        _
      $region10: #{tpu_custom_call.1} parent=5 // pred_check_branch
        %355 = sbr.rel (%p352) target = $region12
      $region11: #{tpu_custom_call.1} parent=5 // pred_region
        %s356 = ssub.s32 %s31, 1
        // Predicated region
        $region13: #{tpu_custom_call.1} parent=11 // pred_check
          %p357 = pneg %p69
        $region14: #{tpu_custom_call.1} parent=11 // pred_check_branch
          %359 = sbr.rel (%p357) target = $region16
        $region15: #{tpu_custom_call.1} parent=11 // pred_region
          %p360 = scmp.lt.s32.totalorder %s40, 0
          %s361 = scalar_select %p360, %s40, 0
          %s362 = smul.addr %s361, 8
          %s363 = scalar_lea.vmem %s1, %s362
        $region16: #{tpu_custom_call.1} parent=11 // pred_fallthru
          _
        // Predicated region
        $region17: #{tpu_custom_call.1} parent=11 // pred_check
          %p364 = pneg %p95
        $region18: #{tpu_custom_call.1} parent=11 // pred_check_branch
          %366 = sbr.rel (%p364) target = $region20
        $region19: #{tpu_custom_call.1} parent=11 // pred_region
          %p367 = scmp.lt.s32.totalorder %s40, 0
          %s368 = scalar_select %p367, %s40, 0
          %s369 = smul.addr %s368, 8
          %s370 = scalar_lea.vmem %s2, %s369
        $region20: #{tpu_custom_call.1} parent=11 // pred_fallthru
          _
        // Predicated region
        $region21: #{tpu_custom_call.1} parent=11 // pred_check
          %p371 = pneg %p121
        $region22: #{tpu_custom_call.1} parent=11 // pred_check_branch
          %373 = sbr.rel (%p371) target = $region24
        $region23: #{tpu_custom_call.1} parent=11 // pred_region
          %p374 = scmp.lt.s32.totalorder %s40, 0
          %s375 = scalar_select %p374, %s40, 0
          %s376 = smul.addr %s375, 8
          %s377 = scalar_lea.vmem %s3, %s376
        $region24: #{tpu_custom_call.1} parent=11 // pred_fallthru
          _
        // Predicated region
        $region25: #{tpu_custom_call.1} parent=11 // pred_check
          %p378 = pneg %p142
        $region26: #{tpu_custom_call.1} parent=11 // pred_check_branch
          %380 = sbr.rel (%p378) target = $region28
        $region27: #{tpu_custom_call.1} parent=11 // pred_region
          _
        $region28: #{tpu_custom_call.1} parent=11 // pred_fallthru
          _
        // Predicated region
        $region29: #{tpu_custom_call.1} parent=11 // pred_check
          %p381 = pneg %p163
        $region30: #{tpu_custom_call.1} parent=11 // pred_check_branch
          %383 = sbr.rel (%p381) target = $region32
        $region31: #{tpu_custom_call.1} parent=11 // pred_region
          _
        $region32: #{tpu_custom_call.1} parent=11 // pred_fallthru
          _
        // Predicated region
        $region33: #{tpu_custom_call.1} parent=11 // pred_check
          %p384 = pneg %p184
        $region34: #{tpu_custom_call.1} parent=11 // pred_check_branch
          %386 = sbr.rel (%p384) target = $region36
        $region35: #{tpu_custom_call.1} parent=11 // pred_region
          _
        $region36: #{tpu_custom_call.1} parent=11 // pred_fallthru
          _
        // Predicated region
        $region37: #{tpu_custom_call.1} parent=11 // pred_check
          %p387 = pneg %p205
        $region38: #{tpu_custom_call.1} parent=11 // pred_check_branch
          %389 = sbr.rel (%p387) target = $region40
        $region39: #{tpu_custom_call.1} parent=11 // pred_region
          _
        $region40: #{tpu_custom_call.1} parent=11 // pred_fallthru
          _
      $region12: #{tpu_custom_call.1} parent=5 // pred_fallthru
        _
      %p390 = scmp.lt.s32.totalorder %s31, 8
      // Predicated region
      $region41: #{tpu_custom_call.1} parent=5 // pred_check
        %p391 = pneg %p390
      $region42: #{tpu_custom_call.1} parent=5 // pred_check_branch
        %393 = sbr.rel (%p391) target = $region44
      $region43: #{tpu_custom_call.1} parent=5 // pred_region
        // Predicated region
        $region45: #{tpu_custom_call.1} parent=43 // pred_check
          %p394 = pneg %p231
        $region46: #{tpu_custom_call.1} parent=43 // pred_check_branch
          %396 = sbr.rel (%p394) target = $region48
        $region47: #{tpu_custom_call.1} parent=43 // pred_region
          %s397 = smul.u32 %s38, 8
          %s398 = sadd.s32 %s397, %s39
          %s399 = sld [smem:[#allocation9 + %s398]]
          %p400 = scmp.lt.s32.totalorder %s399, 31
          %s401 = scalar_select %p400, %s399, 31
          %s402 = smul.addr %s401, 2
          %s403 = smul.addr %s402, 8
          %s404 = scalar_lea.vmem %s8, %s403
          %s405 = smul.u32 %s38, 8
          %s406 = sadd.s32 %s405, %s39
          %s407 = sld [smem:[#allocation9 + %s406]]
        $region48: #{tpu_custom_call.1} parent=43 // pred_fallthru
          _
      $region44: #{tpu_custom_call.1} parent=5 // pred_fallthru
        _
      %p408 = scmp.le.s32.totalorder 1, %s31
      %p409 = scmp.lt.s32.totalorder %s31, 9
      %p410 = pnand %p408, %p409
      %p411 = pneg %p410
      // Predicated region
      $region49: #{tpu_custom_call.1} parent=5 // pred_check
        _
      $region50: #{tpu_custom_call.1} parent=5 // pred_check_branch
        %413 = sbr.rel (%p410) target = $region52
      $region51: #{tpu_custom_call.1} parent=5 // pred_region
        %s414 = ssub.s32 %s31, 1
        %p415 = scmp.lt.s32.totalorder %s40, 0
        %s416 = scalar_select %p415, %s40, 0
        %s417 = smul.addr %s416, 8
        %s418 = scalar_lea.vmem %s1, %s417
        %p419 = pneg %p69
        %p420 = pneg %p66
        %p421 = scmp.lt.s32.totalorder %s40, 0
        %s422 = scalar_select %p421, %s40, 0
        %s423 = smul.addr %s422, 8
        %s424 = scalar_lea.vmem %s2, %s423
        %p425 = pneg %p95
        %p426 = pneg %p92
        %p427 = scmp.lt.s32.totalorder %s40, 0
        %s428 = scalar_select %p427, %s40, 0
        %s429 = smul.addr %s428, 8
        %s430 = scalar_lea.vmem %s3, %s429
        %p431 = pneg %p121
        %p432 = pneg %p118
        %p433 = pneg %p142
        %p434 = pneg %p139
        %p435 = pneg %p163
        %p436 = pneg %p160
        %p437 = pneg %p184
        %p438 = pneg %p181
        %p439 = pneg %p205
        %p440 = pneg %p202
        %s441 = smul.u32 %s40, 8
        %s442 = sadd.s32 %s441, %s41
        %s443 = sld [smem:[#allocation9 + %s442]]
        %p444 = scmp.lt.s32.totalorder %s443, 31
        %s445 = scalar_select %p444, %s443, 31
        %s446 = smul.addr %s445, 2
        %s447 = smul.addr %s446, 8
        %s448 = scalar_lea.vmem %s8, %s447
        %p449 = pneg %p237
        %p450 = pneg %p234
        %p451 = pneg %p258
        %p452 = pneg %p255
        %p453 = pneg %p279
        %p454 = pneg %p276
        %p455 = pneg %p300
        %p456 = pneg %p297
        %p457 = pneg %p321
        %p458 = pneg %p318
        %p459 = pneg %p342
        %p460 = pneg %p339
        %p461 = scmp.lt.s32.totalorder %s40, 0
        %s462 = scalar_select %p461, %s40, 0
        %s463 = smul.addr %s462, 8
        %s464 = scalar_lea.vmem %s1, %s463
        %p465 = scmp.lt.s32.totalorder %s40, 0
        %s466 = scalar_select %p465, %s40, 0
        %s467 = smul.addr %s466, 8
        %s468 = scalar_lea.vmem %s2, %s467
        %p469 = scmp.lt.s32.totalorder %s40, 0
        %s470 = scalar_select %p469, %s40, 0
        %s471 = smul.addr %s470, 8
        %s472 = scalar_lea.vmem %s3, %s471
        %s473 = smul.u32 %s40, 8
        %s474 = sadd.s32 %s473, %s41
        %s475 = sld [smem:[#allocation9 + %s474]]
        %p476 = scmp.lt.s32.totalorder %s475, 31
        %s477 = scalar_select %p476, %s475, 31
        %s478 = smul.addr %s477, 2
        %s479 = smul.addr %s478, 8
        %s480 = scalar_lea.vmem %s8, %s479
        %s481 = smul.u32 %s40, 8
        %s482 = sadd.s32 %s481, %s41
        %s483 = sld [smem:[#allocation9 + %s482]]
        %p484 = scmp.eq.s32.totalorder %s40, 0
        %p485 = scmp.eq.s32.totalorder %s41, 0
        %p486 = pnand %p484, %p485
        %p487 = pneg %p486
        // Predicated region
        $region53: #{tpu_custom_call.1} parent=51 // pred_check
          _
        $region54: #{tpu_custom_call.1} parent=51 // pred_check_branch
          %489 = sbr.rel (%p486) target = $region56
        $region55: #{tpu_custom_call.1} parent=51 // pred_region
          %s490 = scalar_lea.smem [#allocation7], 0
          %491 = sst [smem:[%s490]] 0.0
          %s492 = scalar_lea.smem [#allocation7], 1
          %493 = sst [smem:[%s492]] 0.0
          %vm494 = vcmask 130048
          %495 = vst.msk [vmem:[#allocation4] sm:$0xff] %vm494, 0.0
          %496 = vst.msk [vmem:[#allocation4 + $0x8] sm:$0xff] %vm494, 0.0
          %497 = vst.msk [vmem:[#allocation5] sm:$0xff] %vm494, 0.0
          %498 = vst.msk [vmem:[#allocation5 + $0x8] sm:$0xff] %vm494, 0.0
          %vm499 = vcmask 7168
          %500 = vst.msk [vmem:[#allocation6] sm:$0xff] %vm499, 0.0
          %501 = vst.msk [vmem:[#allocation6 + $0x8] sm:$0xff] %vm499, 0.0
          %502 = vst.msk [vmem:[#allocation19] sm:$0xff] %vm494, 0.0
          %503 = vst.msk [vmem:[#allocation19 + $0x8] sm:$0xff] %vm494, 0.0
        $region56: #{tpu_custom_call.1} parent=51 // pred_fallthru
          _
        // Predicated region
        $region57: #{tpu_custom_call.1} parent=51 // pred_check
          %p504 = pneg %p485
        $region58: #{tpu_custom_call.1} parent=51 // pred_check_branch
          %506 = sbr.rel (%p504) target = $region60
        $region59: #{tpu_custom_call.1} parent=51 // pred_region
          %v507 = vlaneseq
          %v508 = vshrl.u32 %v507, 7
          %s509 = smul.u32 %s40, 8
          %v510 = vstv %s509
          %v511 = vadd.s32 %v508, %v510
          %vm512 = vcmp.lt.s32.totalorder %v511, 8
          %v513 = vsel %vm512, 1, 0
          %v514 = vcvt.s32.f32 %v513
          %v515 = vld [vmem:[%s464] sm:$0xff]
          %vm516 = vcmask 130048
          %v517 = vsel %vm516, %v515, -inf
          %518 = vmax.xlane.f32.xlu0 %v517
          %v519 = vpop.xlane.xlu0 %518
          %v520 = vsub.f32 %v515, %v519
          %v521 = vmul.f32 %v520, 1.442695
          %v522 = vpow.pop %v521
          %v523 = vsel %vm516, %v522, 0.0
          %524 = vadd.xlane.f32.xlu0 %v523
          %v525 = vpop.xlane.xlu0 %524
          %v526 = vrcp.pop %v525
          %v527 = vmul.f32 %v522, %v526
          %v528 = vlaneseq
          %v529 = vand.u32 %v528, 127
          %v530 = vld [vmem:[%s468] sm:$0xff]
          %531 = vset.pattern.permute.xlu0 0
          %532 = vperm.xlu0 %531, %v530
          %v533 = vpop.permute.xlu0 %532
          %vm534 = vcmp.eq.s32.totalorder %v529, %v533
          %v535 = vsel %vm534, 1, 0
          %v536 = vcvt.s32.f32 %v535
          %s537 = sld [smem:[#allocation7]]
          %v538 = vadd.f32 %v527, 1e-08
          %v539 = vlog2.pop %v538
          %v540 = vmul.f32 %v539, 0.6931472
          %v541 = vmul.f32 %v536, %v540
          %v542 = vsel %vm516, %v541, 0.0
          %543 = vadd.xlane.f32.xlu0 %v542
          %v544 = vpop.xlane.xlu0 %543
          %v545 = vmul.f32 %v514, %v544
          %vm546 = vcmask 7168
          %v547 = vsel %vm546, %v545, 0.0
          %548 = vadd.xlane.f32.xlu0 %v547
          %v549 = vpop.xlane.xlu0 %548
          %v550 = vrot.slane %v549, 4
          %v551 = vadd.f32 %v549, %v550
          %v552 = vrot.slane %v551, 2
          %v553 = vadd.f32 %v551, %v552
          %v554 = vrot.slane %v553, 1
          %v555 = vadd.f32 %v553, %v554
          %s556 = vtos %v555
          %s557 = sadd.f32 %s537, %s556
          %s558 = scalar_lea.smem [#allocation7], 0
          %559 = sst [smem:[%s558]] %s557
          %v560 = vld [vmem:[%s472] sm:$0xff]
          %v561 = vsel %vm516, %v560, -inf
          %562 = vmax.xlane.f32.xlu0 %v561
          %v563 = vpop.xlane.xlu0 %562
          %v564 = vsub.f32 %v560, %v563
          %v565 = vmul.f32 %v564, 1.442695
          %v566 = vpow.pop %v565
          %v567 = vsel %vm516, %v566, 0.0
          %568 = vadd.xlane.f32.xlu0 %v567
          %v569 = vpop.xlane.xlu0 %568
          %v570 = vrcp.pop %v569
          %v571 = vmul.f32 %v566, %v570
          %s572 = sld [smem:[#allocation7 + $0x1]]
          %v573 = vld [vmem:[%s4] sm:$0x1]
          %v574 = vadd.f32 %v571, 1e-05
          %v575 = vlog2.pop %v574
          %v576 = vmul.f32 %v575, 0.6931472
          %v578 = vlaneseq
          %v579 = vshrl.u32 %v578, 7
          %v580 = vsub.s32 0, %v579
          %v581 = vrot.slane %v573, %v580
          %v583 = vmul.f32 %v581, %v576
          %v584 = vsel %vm516, %v583, 0.0
          %585 = vadd.xlane.f32.xlu0 %v584
          %v586 = vpop.xlane.xlu0 %585
          %v587 = vmul.f32 %v514, %v586
          %v588 = vsel %vm546, %v587, 0.0
          %589 = vadd.xlane.f32.xlu0 %v588
          %v590 = vpop.xlane.xlu0 %589
          %v591 = vrot.slane %v590, 4
          %v592 = vadd.f32 %v590, %v591
          %v593 = vrot.slane %v592, 2
          %v594 = vadd.f32 %v592, %v593
          %v595 = vrot.slane %v594, 1
          %v596 = vadd.f32 %v594, %v595
          %s597 = vtos %v596
          %s598 = sadd.f32 %s572, %s597
          %s599 = scalar_lea.smem [#allocation7], 1
          %600 = sst [smem:[%s599]] %s598
          %v601 = vadd.f32 %v527, 1e-05
          %v602 = vlog2.pop %v601
          %v603 = vmul.f32 %v602, 0.6931472
          %v604 = vsub.f32 0.0, %v603
          %605 = vst.msk [vmem:[#allocation2] sm:$0xff] %vm516, %v604
        $region60: #{tpu_custom_call.1} parent=51 // pred_fallthru
          _
        %s606 = smul.u32 %s40, 8
        %s607 = sadd.s32 %s606, %s41
        %p608 = scmp.lt.s32.totalorder %s607, 8
        %s609 = scalar_select %p608, 1, 0
        %s610 = scvt.s32.f32 %s609
        %v611 = vld [vmem:[%s480] sm:$0xff]
        %v612 = vld [vmem:[%s480 + $0x8] sm:$0xff]
        %vm613 = vcmp.gt.f32.partialorder %v611, 0.0
        %vm614 = vcmp.gt.f32.partialorder %v612, 0.0
        %v615 = vsel %vm613, 1, 0
        %v616 = vsel %vm614, 1, 0
        %v617 = vcvt.s32.f32 %v615
        %v618 = vcvt.s32.f32 %v616
        %vm619 = vcmask 130048
        %v620 = vsel %vm619, %v617, 0.0
        %621 = vadd.xlane.f32.xlu0 %v620
        %v622 = vpop.xlane.xlu0 %621
        %v623 = vsel %vm619, %v618, 0.0
        %624 = vadd.xlane.f32.xlu0 %v623
        %v625 = vpop.xlane.xlu0 %624
        %v626 = vstv %s610
        %v627 = vmul.f32 %v622, %v626
        %v628 = vmul.f32 %v625, %v626
        %s629 = scalar_lea.vmem [#allocation2], %s41
        %v630 = vld [vmem:[%s629] sm:$0x1]
        %v631 = vmul.f32 %v611, %v627
        %v632 = vmul.f32 %v612, %v628
        %v633 = vld [vmem:[#allocation4] sm:$0xff]
        %v634 = vld [vmem:[#allocation4 + $0x8] sm:$0xff]
        %v635 = vlaneseq
        %v636 = vshrl.u32 %v635, 7
        %v637 = vsub.s32 0, %v636
        %v638 = vrot.slane %v630, %v637
        %v639 = vmul.f32 %v631, %v638
        %v640 = vmul.f32 %v632, %v638
        %v641 = vadd.f32 %v633, %v639
        %v642 = vadd.f32 %v634, %v640
        %643 = vst.msk [vmem:[#allocation4] sm:$0xff] %vm619, %v641
        %644 = vst.msk [vmem:[#allocation4 + $0x8] sm:$0xff] %vm619, %v642
        %v645 = vld [vmem:[#allocation5] sm:$0xff]
        %v646 = vld [vmem:[#allocation5 + $0x8] sm:$0xff]
        %v647 = vadd.f32 %v645, %v631
        %v648 = vadd.f32 %v646, %v632
        %649 = vst.msk [vmem:[#allocation5] sm:$0xff] %vm619, %v647
        %650 = vst.msk [vmem:[#allocation5 + $0x8] sm:$0xff] %vm619, %v648
        %v651 = vld [vmem:[#allocation6] sm:$0xff]
        %v652 = vld [vmem:[#allocation6 + $0x8] sm:$0xff]
        %v653 = vadd.f32 %v651, %v627
        %v654 = vadd.f32 %v652, %v628
        %vm655 = vcmask 7168
        %656 = vst.msk [vmem:[#allocation6] sm:$0xff] %vm655, %v653
        %657 = vst.msk [vmem:[#allocation6 + $0x8] sm:$0xff] %vm655, %v654
        %v660 = vlaneseq
        %v661 = vand.u32 %v660, 127
        %v662 = vlaneseq
        %v663 = vshrl.u32 %v662, 7
        %v664 = vsub.s32 %v661, %v663
        %v665 = vrot.slane %v627, %v664
        %v666 = vadd.s32 %v661, 4294967288
        %v667 = vlaneseq
        %v668 = vshrl.u32 %v667, 7
        %v669 = vsub.s32 %v666, %v668
        %v670 = vrot.slane %v628, %v669
        %vm671 = vcmask 130112
        %v672 = vsel %vm671, %v670, %v665
        %s674 = scalar_lea.vmem [#allocation3], %s41
        %vm675 = vcmask 122880
        %676 = vst.msk [vmem:[%s674] sm:$0x1] %vm675, %v672
        %p677 = scmp.eq.s32.totalorder %s41, 7
        // Predicated region
        $region61: #{tpu_custom_call.1} parent=51 // pred_check
          %p678 = pneg %p677
        $region62: #{tpu_custom_call.1} parent=51 // pred_check_branch
          %680 = sbr.rel (%p678) target = $region64
        $region63: #{tpu_custom_call.1} parent=51 // pred_region
          %v681 = vld [vmem:[#allocation19] sm:$0xff]
          %v682 = vld [vmem:[#allocation19 + $0x8] sm:$0xff]
          %v683 = vld [vmem:[#allocation3] sm:$0xff]
          %v684 = vld [vmem:[#allocation2] sm:$0xff]
          %685 = vxpose.xlu0.b32.start [1/16] %v683, 128
          %686 = vxpose.xlu0.b32.cont [2/16] 0.0, 128
          %687 = vxpose.xlu0.b32.cont [3/16] 0.0, 128
          %688 = vxpose.xlu0.b32.cont [4/16] 0.0, 128
          %689 = vxpose.xlu0.b32.cont [5/16] 0.0, 128
          %690 = vxpose.xlu0.b32.cont [6/16] 0.0, 128
          %691 = vxpose.xlu0.b32.cont [7/16] 0.0, 128
          %692 = vxpose.xlu0.b32.cont [8/16] 0.0, 128
          %693 = vxpose.xlu0.b32.cont [9/16] 0.0, 128
          %694 = vxpose.xlu0.b32.cont [10/16] 0.0, 128
          %695 = vxpose.xlu0.b32.cont [11/16] 0.0, 128
          %696 = vxpose.xlu0.b32.cont [12/16] 0.0, 128
          %697 = vxpose.xlu0.b32.cont [13/16] 0.0, 128
          %698 = vxpose.xlu0.b32.cont [14/16] 0.0, 128
          %699 = vxpose.xlu0.b32.cont [15/16] 0.0, 128
          %700 = vxpose.xlu0.b32.end [16/16] 0.0, 128
          %v701 = vpop.trf.xlu0
          %v702 = vpop.trf.xlu0
          %v703 = vpop.trf.xlu0
          %v704 = vpop.trf.xlu0
          %v705 = vpop.trf.xlu0
          %v706 = vpop.trf.xlu0
          %v707 = vpop.trf.xlu0
          %v708 = vpop.trf.xlu0
          %v709 = vpop.trf.xlu0
          %v710 = vpop.trf.xlu0
          %v711 = vpop.trf.xlu0
          %v712 = vpop.trf.xlu0
          %v713 = vpop.trf.xlu0
          %v714 = vpop.trf.xlu0
          %v715 = vpop.trf.xlu0
          %v716 = vpop.trf.xlu0
          %vm717 = vcmask 64512
          %v719 = vsel %vm717, %v701, 0
          %v722 = vsel %vm717, %v702, 0
          %724 = vmatprep.subr.mxu0 0.0
          %725 = vmatpush1.msra.mxu0 0.0
          %726 = vmatprep.subr.mxu0 0.0
          %727 = vmatpush1.msra.mxu0 0.0
          %728 = vmatprep.subr.mxu0 0.0
          %729 = vmatpush1.msra.mxu0 0.0
          %730 = vmatprep.subr.mxu0 0.0
          %731 = vmatpush1.msra.mxu0 0.0
          %732 = vmatprep.subr.mxu0 0.0
          %733 = vmatpush1.msra.mxu0 0.0
          %734 = vmatprep.subr.mxu0 0.0
          %735 = vmatpush1.msra.mxu0 0.0
          %736 = vmatprep.subr.mxu0 0.0
          %737 = vmatpush1.msra.mxu0 0.0
          %738 = vmatprep.subr.mxu0 0.0
          %739 = vmatpush1.msra.mxu0 0.0
          %740 = vmatprep.subr.mxu0 0.0
          %741 = vmatpush1.msra.mxu0 0.0
          %742 = vmatprep.subr.mxu0 0.0
          %743 = vmatpush1.msra.mxu0 0.0
          %744 = vmatprep.subr.mxu0 0.0
          %745 = vmatpush1.msra.mxu0 0.0
          %746 = vmatprep.subr.mxu0 0.0
          %747 = vmatpush1.msra.mxu0 0.0
          %748 = vmatprep.subr.mxu0 0.0
          %749 = vmatpush1.msra.mxu0 0.0
          %750 = vmatprep.subr.mxu0 0.0
          %751 = vmatpush1.msra.mxu0 0.0
          %752 = vmatprep.subr.mxu0 0.0
          %753 = vmatpush1.msra.mxu0 0.0
          %754 = vmatprep.subr.mxu0 0.0
          %755 = vmatpush1.msra.mxu0 %v684
          %756 = vmatprep.subr.mxu0 0.0
          %757 = vmatpush2.msra.mxu0 0.0
          %758 = vmatprep.subr.mxu0 0.0
          %759 = vmatpush2.msra.mxu0 0.0
          %760 = vmatprep.subr.mxu0 0.0
          %761 = vmatpush2.msra.mxu0 0.0
          %762 = vmatprep.subr.mxu0 0.0
          %763 = vmatpush2.msra.mxu0 0.0
          %764 = vmatprep.subr.mxu0 0.0
          %765 = vmatpush2.msra.mxu0 0.0
          %766 = vmatprep.subr.mxu0 0.0
          %767 = vmatpush2.msra.mxu0 0.0
          %768 = vmatprep.subr.mxu0 0.0
          %769 = vmatpush2.msra.mxu0 0.0
          %770 = vmatprep.subr.mxu0 0.0
          %771 = vmatpush2.msra.mxu0 0.0
          %772 = vmatprep.subr.mxu0 0.0
          %773 = vmatpush2.msra.mxu0 0.0
          %774 = vmatprep.subr.mxu0 0.0
          %775 = vmatpush2.msra.mxu0 0.0
          %776 = vmatprep.subr.mxu0 0.0
          %777 = vmatpush2.msra.mxu0 0.0
          %778 = vmatprep.subr.mxu0 0.0
          %779 = vmatpush2.msra.mxu0 0.0
          %780 = vmatprep.subr.mxu0 0.0
          %781 = vmatpush2.msra.mxu0 0.0
          %782 = vmatprep.subr.mxu0 0.0
          %783 = vmatpush2.msra.mxu0 0.0
          %784 = vmatprep.subr.mxu0 0.0
          %785 = vmatpush2.msra.mxu0 0.0
          %786 = vmatprep.subr.mxu0 0.0
          %787 = vmatpush2.msra.mxu0 0.0
          %788 = vmatprep.mubr.f32.mxu0 0.0
          %789 = vmatmul.mubr.f32.gmra.mxu0 %v719
          %v790 = vpop.f32.mrf.mxu0
          %v791 = vadd.f32 0.0, %v790
          %v792 = vpop.f32.mrf.mxu0
          %793 = vmatprep.mubr.f32.mxu0 0.0
          %794 = vmatmul.mubr.f32.gmra.mxu0 %v722
          %v795 = vpop.f32.mrf.mxu0
          %v796 = vadd.f32 0.0, %v795
          %v797 = vpop.f32.mrf.mxu0
          %798 = vdwg.mxu0
          %v799 = vadd.f32 %v681, %v791
          %v800 = vadd.f32 %v682, %v796
          %801 = vst.msk [vmem:[#allocation19] sm:$0xff] %vm619, %v799
          %802 = vst.msk [vmem:[#allocation19 + $0x8] sm:$0xff] %vm619, %v800
        $region64: #{tpu_custom_call.1} parent=51 // pred_fallthru
          _
        %p803 = pnand %p484, %p677
        %p804 = pneg %p803
        // Predicated region
        $region65: #{tpu_custom_call.1} parent=51 // pred_check
          _
        $region66: #{tpu_custom_call.1} parent=51 // pred_check_branch
          %806 = sbr.rel (%p803) target = $region68
        $region67: #{tpu_custom_call.1} parent=51 // pred_region
          %s807 = sld [smem:[#allocation7]]
          %s808 = ssub.f32 0.0, %s807
          %v809 = vrcp.pop 8.0
          %s810 = vtos %v809
          %s811 = smul.f32 %s808, %s810
          %s812 = sld [smem:[#allocation7 + $0x1]]
          %s813 = ssub.f32 0.0, %s812
          %v814 = vrcp.pop 8.0
          %s815 = vtos %v814
          %s816 = smul.f32 %s813, %s815
          %v817 = vld [vmem:[#allocation6] sm:$0xff]
          %v818 = vld [vmem:[#allocation6 + $0x8] sm:$0xff]
          %vm819 = vcmp.eq.f32.partialorder %v817, 0.0
          %vm820 = vcmp.eq.f32.partialorder %v818, 0.0
          %v821 = vsel %vm819, 1.0, %v817
          %v822 = vsel %vm820, 1.0, %v818
          %v823 = vld [vmem:[%s6] sm:$0xff]
          %v824 = vld [vmem:[%s6 + $0x8] sm:$0xff]
          %v825 = vrcp.pop %v821
          %v826 = vmul.f32 %v823, %v825
          %v827 = vrcp.pop %v822
          %v828 = vmul.f32 %v824, %v827
          %v829 = vld [vmem:[#allocation4] sm:$0xff]
          %v830 = vld [vmem:[#allocation4 + $0x8] sm:$0xff]
          %v831 = vld [vmem:[%s5] sm:$0xff]
          %v832 = vld [vmem:[%s5 + $0x8] sm:$0xff]
          %v833 = vld [vmem:[#allocation5] sm:$0xff]
          %v834 = vld [vmem:[#allocation5 + $0x8] sm:$0xff]
          %v835 = vmul.f32 %v831, %v833
          %v836 = vmul.f32 %v832, %v834
          %v837 = vsub.f32 %v829, %v835
          %v838 = vsub.f32 %v830, %v836
          %840 = vset.pattern.permute.xlu0 0
          %841 = vperm.xlu0 %840, %v826
          %v842 = vpop.permute.xlu0 %841
          %845 = vset.pattern.permute.xlu0 0
          %846 = vperm.xlu0 %845, %v828
          %v847 = vpop.permute.xlu0 %846
          %v849 = vmul.f32 %v842, %v837
          %v850 = vmul.f32 %v847, %v838
          %v851 = vsel %vm619, %v849, 0.0
          %v852 = vsel %vm619, %v850, 0.0
          %v853 = vadd.f32 %v851, %v852
          %854 = vadd.xlane.f32.xlu0 %v853
          %v855 = vpop.xlane.xlu0 %854
          %v856 = vrot.slane %v855, 4
          %v857 = vadd.f32 %v855, %v856
          %v858 = vrot.slane %v857, 2
          %v859 = vadd.f32 %v857, %v858
          %v860 = vrot.slane %v859, 1
          %v861 = vadd.f32 %v859, %v860
          %s862 = vtos %v861
          %s863 = scalar_lea.smem [#allocation14], 0
          %864 = sst [smem:[%s863]] %s811
          %s865 = scalar_lea.smem [#allocation16], 0
          %866 = sst [smem:[%s865]] %s816
          %s867 = scalar_lea.smem [#allocation17], 0
          %868 = sst [smem:[%s867]] %s862
          %s869 = sld [smem:[#allocation10]]
          %s870 = smul.f32 %s869, %s816
          %s871 = ssub.f32 %s811, %s870
          %s872 = ssub.f32 %s871, %s862
          %s873 = scalar_lea.smem [#allocation11], 0
          %874 = sst [smem:[%s873]] %s872
        $region68: #{tpu_custom_call.1} parent=51 // pred_fallthru
          _
        // Predicated region
        $region69: #{tpu_custom_call.1} parent=51 // pred_check
          %p875 = pneg %p255
        $region70: #{tpu_custom_call.1} parent=51 // pred_check_branch
          %877 = sbr.rel (%p875) target = $region72
        $region71: #{tpu_custom_call.1} parent=51 // pred_region
          %s879 = ssub.s32 16, 16
          %880 = vsyncadd [#allocation13], %s879
          %883 = dma.smem_to_hbm [#allocation11], 16, %s9, [#allocation13]
        $region72: #{tpu_custom_call.1} parent=51 // pred_fallthru
          _
        // Predicated region
        $region73: #{tpu_custom_call.1} parent=51 // pred_check
          %p884 = pneg %p276
        $region74: #{tpu_custom_call.1} parent=51 // pred_check_branch
          %886 = sbr.rel (%p884) target = $region76
        $region75: #{tpu_custom_call.1} parent=51 // pred_region
          %s888 = ssub.s32 16, 16
          %889 = vsyncadd [#allocation15], %s888
          %892 = dma.smem_to_hbm [#allocation14], 16, %s10, [#allocation15]
        $region76: #{tpu_custom_call.1} parent=51 // pred_fallthru
          _
        // Predicated region
        $region77: #{tpu_custom_call.1} parent=51 // pred_check
          %p893 = pneg %p297
        $region78: #{tpu_custom_call.1} parent=51 // pred_check_branch
          %895 = sbr.rel (%p893) target = $region80
        $region79: #{tpu_custom_call.1} parent=51 // pred_region
          %s897 = ssub.s32 16, 16
          %898 = vsyncadd [#allocation15], %s897
          %901 = dma.smem_to_hbm [#allocation16], 16, %s11, [#allocation15]
        $region80: #{tpu_custom_call.1} parent=51 // pred_fallthru
          _
        // Predicated region
        $region81: #{tpu_custom_call.1} parent=51 // pred_check
          %p902 = pneg %p318
        $region82: #{tpu_custom_call.1} parent=51 // pred_check_branch
          %904 = sbr.rel (%p902) target = $region84
        $region83: #{tpu_custom_call.1} parent=51 // pred_region
          %s906 = ssub.s32 16, 16
          %907 = vsyncadd [#allocation18], %s906
          %910 = dma.smem_to_hbm [#allocation17], 16, %s12, [#allocation18]
        $region84: #{tpu_custom_call.1} parent=51 // pred_fallthru
          _
        // Predicated region
        $region85: #{tpu_custom_call.1} parent=51 // pred_check
          %p911 = pneg %p339
        $region86: #{tpu_custom_call.1} parent=51 // pred_check_branch
          %913 = sbr.rel (%p911) target = $region88
        $region87: #{tpu_custom_call.1} parent=51 // pred_region
          %s915 = ssub.s32 256, 256
          %916 = vsyncadd [#allocation12], %s915
          %s917 = sshll.u32 [#allocation19], 4
          %s918 = int_to_ptr.vmem [resolvable:$true] %s917
          %923 = dma.vmem_to_hbm [thread:$0]  %s918, 256, %s13, [#allocation12], 128, 128, 8
        $region88: #{tpu_custom_call.1} parent=51 // pred_fallthru
          _
        // Predicated region
        $region89: #{tpu_custom_call.1} parent=51 // pred_check
          %p924 = pneg %p255
        $region90: #{tpu_custom_call.1} parent=51 // pred_check_branch
          %926 = sbr.rel (%p924) target = $region92
        $region91: #{tpu_custom_call.1} parent=51 // pred_region
          %927 = dma.done [#allocation13], 16
        $region92: #{tpu_custom_call.1} parent=51 // pred_fallthru
          _
        // Predicated region
        $region93: #{tpu_custom_call.1} parent=51 // pred_check
          %p928 = pneg %p276
        $region94: #{tpu_custom_call.1} parent=51 // pred_check_branch
          %930 = sbr.rel (%p928) target = $region96
        $region95: #{tpu_custom_call.1} parent=51 // pred_region
          %931 = dma.done [#allocation15], 16
        $region96: #{tpu_custom_call.1} parent=51 // pred_fallthru
          _
        // Predicated region
        $region97: #{tpu_custom_call.1} parent=51 // pred_check
          %p932 = pneg %p297
        $region98: #{tpu_custom_call.1} parent=51 // pred_check_branch
          %934 = sbr.rel (%p932) target = $region100
        $region99: #{tpu_custom_call.1} parent=51 // pred_region
          %935 = dma.done [#allocation15], 16
        $region100: #{tpu_custom_call.1} parent=51 // pred_fallthru
          _
        // Predicated region
        $region101: #{tpu_custom_call.1} parent=51 // pred_check
          %p936 = pneg %p318
        $region102: #{tpu_custom_call.1} parent=51 // pred_check_branch
          %938 = sbr.rel (%p936) target = $region104
        $region103: #{tpu_custom_call.1} parent=51 // pred_region
          %939 = dma.done [#allocation18], 16
        $region104: #{tpu_custom_call.1} parent=51 // pred_fallthru
          _
        // Predicated region
        $region105: #{tpu_custom_call.1} parent=51 // pred_check
          %p940 = pneg %p339
        $region106: #{tpu_custom_call.1} parent=51 // pred_check_branch
          %942 = sbr.rel (%p940) target = $region108
        $region107: #{tpu_custom_call.1} parent=51 // pred_region
          %943 = dma.done [#allocation12], 256
        $region108: #{tpu_custom_call.1} parent=51 // pred_fallthru
          _
        %944 = sfence
      $region52: #{tpu_custom_call.1} parent=5 // pred_fallthru
        _
      %p945 = scmp.le.s32.totalorder 2, %s31
      // Predicated region
      $region109: #{tpu_custom_call.1} parent=5 // pred_check
        %p946 = pneg %p945
      $region110: #{tpu_custom_call.1} parent=5 // pred_check_branch
        %948 = sbr.rel (%p946) target = $region112
      $region111: #{tpu_custom_call.1} parent=5 // pred_region
        %s949 = ssub.s32 %s31, 2
      $region112: #{tpu_custom_call.1} parent=5 // pred_fallthru
        _
    $region6: #{tpu_custom_call.1} parent=1 // loop_footer
      %s35 = sadd.s32 1, %s31
    $region7: #{tpu_custom_call.1} parent=1 // loop_footer_branch
      %30 = sbr.rel target = $region3
    $region8: #{tpu_custom_call.1} parent=1 // loop_exit
      _
    %950 = vsyncpa [#allocation12], 1
    %s951 = scalar_lea.sflag [#allocation12], 1
    %952 = vsyncpa %s951, 1
    %953 = vsyncpa [#allocation13], 1
    %s954 = scalar_lea.sflag [#allocation13], 1
    %955 = vsyncpa %s954, 1
    %956 = vsyncpa [#allocation15], 1
    %957 = vsyncpa [#allocation18], 1

</llo_original>
